<compile_context>
chip_gen: v7x
topology: tpu7x:2x2x1
jax: 0.10.0
libtpu: 0.0.40
codegen_flags: <defaults>
</compile_context>

<pallas_src>
import math
import jax
import jax.numpy as jnp
from jax.experimental import pallas as pl
from jax.experimental.pallas import tpu as pltpu


# ----------------------------------------------------------------------------
# Fused SIMPMP layer kernel.
# Grid = (row_tiles, num_relations); relation axis is the reduction (last).
# ----------------------------------------------------------------------------
def _make_layer_kernel(din, dbal, dout, relu_out):
    # static lane offsets into the fused hs-projection [t_fr | t_be | balance_hid | self]
    t0, t1, t2, t3 = 0, din, 2 * din, 2 * din + dbal

    def kernel(a_ref, hm_ref, hs_ref,
               w_hs_ref, b_hs_ref, w_b2_ref, b_b2_ref,
               w_cat_ref, b_fr_ref, b_be_ref,
               w_tail_ref, b_tail_ref,
               o_ref,
               tfr_sc, tbe_sc, bal_sc, self_sc, acc_sc):
        r = pl.program_id(1)
        f32 = jnp.float32

        # ---- relation-invariant work: hoisted, runs once per row tile --------
        @pl.when(r == 0)
        def _():
            hs = hs_ref[...]
            # one wide matmul for trans_src(fraud), trans_src(benign),
            # fc_balance layer 1, and fc_self (they all share K = din).
            proj = jnp.dot(hs, w_hs_ref[...], preferred_element_type=f32) + b_hs_ref[...]
            tfr_sc[...] = proj[:, t0:t1]
            tbe_sc[...] = proj[:, t1:t2]
            hid = jnp.maximum(proj[:, t2:t3], 0.0)
            bal_sc[...] = jax.nn.sigmoid(
                jnp.dot(hid, w_b2_ref[...], preferred_element_type=f32) + b_b2_ref[...])
            self_sc[...] = proj[:, t3:]                       # fc_self(h_self) + bias
            acc_sc[...] = jnp.zeros_like(acc_sc)

        # ---- per-relation work ------------------------------------------------
        # single bf16 MXU pass computing all three label-masked aggregations:
        # agg = A_r @ [h*is_fraud | h*is_benign | h*is_unknown]
        agg = jnp.dot(a_ref[...], hm_ref[...], preferred_element_type=f32)  # (tm, 3*din)
        nf = agg[:, :din]
        nb = agg[:, din:2 * din]
        nu = agg[:, 2 * din:]

        bal = bal_sc[...]
        # fraud(nf) + benign(nb) + bal*fraud(nu) + (1-bal)*benign(nu)
        # folded into one (tm, 2*din) x (2*din, dout) matmul (linearity in LHS);
        # elementwise math stays f32 (v5e VPU has no bf16).
        lhs = jnp.concatenate(
            [(nf + bal * nu) * tfr_sc[...],
             (nb + (1.0 - bal) * nu) * tbe_sc[...]], axis=1)
        h_neigh = (jnp.dot(lhs, w_cat_ref[...], preferred_element_type=f32)
                   + (1.0 + bal) * b_fr_ref[...]
                   + (2.0 - bal) * b_be_ref[...])

        # rst = ReLU(fc_self(h_self) + h_neigh); relation_agg == 'add'
        acc_sc[...] += jnp.maximum(self_sc[...] + h_neigh, 0.0)

        # ---- epilogue: relation_mlp (with Conv1d k=1 proj folded in for the last
        #      layer), applied once per row tile after the relation reduction ----
        @pl.when(r == pl.num_programs(1) - 1)
        def _():
            y = (jnp.dot(acc_sc[...], w_tail_ref[...], preferred_element_type=f32)
                 + b_tail_ref[...])
            if relu_out:
                y = jnp.maximum(y, 0.0)
            o_ref[...] = y.astype(o_ref.dtype)

    return kernel


def lasage_layer_fused(A_bf16, hm_bf16, h, conv, w_tail, b_tail, *, relu_out, tm=None):
    """One SIMPMP layer (all relations summed) + fused tail linear.

    A_bf16:  (R, N, N) bf16 dense adjacency (dst, src)
    hm_bf16: (N, 3*Din) bf16  = [h*m_fraud | h*m_benign | h*m_unknown]
    h:       (N, Din) f32 node features (used as h_self)
    """
    R, N, _ = A_bf16.shape
    din = h.shape[1]
    dbal = conv["w_b1"].shape[1]
    dout = conv["w_self"].shape[1]
    dtail = w_tail.shape[1]

    if tm is None:
        tm = N
        for cand in (512, 256, 128, 64, 32, 16, 8):
            if N % cand == 0:
                tm = cand
                break
    # TODO(synk): pad N to a multiple of tm (with zero adjacency rows) for ragged graphs.
    assert N % tm == 0, "N must be a multiple of the row tile"

    # ---- wrapper-side weight fusions ----------------------------------------
    # hs-side projections sharing K = din -> one (din, 2*din + dbal + dout) matrix
    w_hs = jnp.concatenate([conv["wt_fr"], conv["wt_be"], conv["w_b1"], conv["w_self"]], axis=1)
    b_hs = jnp.concatenate([conv["bt_fr"], conv["bt_be"], conv["b_b1"], conv["b_self"]], axis=1)
    # fraud/benign output projections stacked on K
    w_cat = jnp.concatenate([conv["w_fr"], conv["w_be"]], axis=0)

    full = lambda i, r: (0, 0)
    grid = (N // tm, R)

    in_specs = [
        pl.BlockSpec((None, tm, N), lambda i, r: (r, i, 0)),          # A (relation r, dst tile)
        pl.BlockSpec((N, 3 * din), full),                             # masked features (bf16)
        pl.BlockSpec((tm, din), lambda i, r: (i, 0)),                 # h_self rows
        pl.BlockSpec((din, 2 * din + dbal + dout), full),             # W_hs
        pl.BlockSpec((1, 2 * din + dbal + dout), full),               # b_hs
        pl.BlockSpec((dbal, 1), full), pl.BlockSpec((1, 1), full),    # fc_balance layer 2
        pl.BlockSpec((2 * din, dout), full),                          # [w_fr; w_be]
        pl.BlockSpec((1, dout), full), pl.BlockSpec((1, dout), full), # b_fr, b_be
        pl.BlockSpec((dout, dtail), full), pl.BlockSpec((1, dtail), full),  # fused tail
    ]
    out_spec = pl.BlockSpec((tm, dtail), lambda i, r: (i, 0))

    scratch = [
        pltpu.VMEM((tm, din), jnp.float32),    # t_fr  = trans_src_fraud(h_self)
        pltpu.VMEM((tm, din), jnp.float32),    # t_be  = trans_src_benign(h_self)
        pltpu.VMEM((tm, 1), jnp.float32),      # balance gate (sigmoid)
        pltpu.VMEM((tm, dout), jnp.float32),   # fc_self(h_self) + bias
        pltpu.VMEM((tm, dout), jnp.float32),   # relation-sum accumulator
    ]

    return pl.pallas_call(
        _make_layer_kernel(din, dbal, dout, relu_out),
        out_shape=jax.ShapeDtypeStruct((N, dtail), jnp.float32),
        grid=grid,
        in_specs=in_specs,
        out_specs=out_spec,
        scratch_shapes=scratch,
        compiler_params=pltpu.CompilerParams(
            dimension_semantics=("parallel", "arbitrary")),
    )(A_bf16, hm_bf16, h,
      w_hs, b_hs, conv["w_b2"], conv["b_b2"],
      w_cat, conv["b_fr"], conv["b_be"],
      w_tail, b_tail)


# ----------------------------------------------------------------------------
# Full SIMPMP forward (num_layers=1, relation_agg='add', proj=True, eval mode).
# ----------------------------------------------------------------------------
def simpmp_forward(A, feats, labels, params):
    f32 = jnp.float32
    m0 = (labels == 0).astype(f32)[:, None]
    m1 = (labels == 1).astype(f32)[:, None]
    m2 = (labels == 2).astype(f32)[:, None]

    # A is exactly 0/1 -> lossless in bf16; halves the dominant HBM->VMEM traffic
    # and runs the aggregation on the native bf16 MXU path.
    A_bf16 = A.astype(jnp.bfloat16)

    h = feats
    layer_params = params["layers"]
    n_layers = len(layer_params)
    for l, lp in enumerate(layer_params):
        # precompute masked source features once per layer -> single agg matmul in-kernel
        hm = jnp.concatenate([h * m1, h * m0, h * m2], axis=1).astype(jnp.bfloat16)
        last = (l == n_layers - 1)
        if last:
            # no ReLU after the last relation_mlp -> fold the Conv1d(k=1) proj into it
            w_tail = lp["w_mlp"] @ params["w_proj"]
            b_tail = lp["b_mlp"] @ params["w_proj"] + params["b_proj"]
            relu_out = False
        else:
            w_tail, b_tail, relu_out = lp["w_mlp"], lp["b_mlp"], True
        h = lasage_layer_fused(A_bf16, hm, h, lp["conv"], w_tail, b_tail, relu_out=relu_out)
    return h


# ----------------------------------------------------------------------------
# Deterministic parameter init (shapes from the module __init__; synthetic values)
# ----------------------------------------------------------------------------
def _init_linear(key, fan_in, fan_out):
    kw, kb = jax.random.split(key)
    s = 1.0 / math.sqrt(fan_in)
    w = jax.random.uniform(kw, (fan_in, fan_out), jnp.float32, -s, s)   # stored as (in, out)
    b = jax.random.uniform(kb, (1, fan_out), jnp.float32, -s, s)
    return w, b


def init_params(key, in_size, hid_size, out_size, out_proj_size):
    ks = jax.random.split(key, 16)
    # single LASAGESConv layer: in_size -> out_size, hid_feats = hid_size (== out_size here)
    wt_fr, bt_fr = _init_linear(ks[0], in_size, in_size)     # LILinear.trans_src (fraud)
    w_fr, b_fr = _init_linear(ks[1], in_size, out_size)      # LILinear.weight/bias (fraud)
    wt_be, bt_be = _init_linear(ks[2], in_size, in_size)     # (benign)
    w_be, b_be = _init_linear(ks[3], in_size, out_size)
    w_b1, b_b1 = _init_linear(ks[4], in_size, hid_size)      # fc_balance layer 1
    w_b2, b_b2 = _init_linear(ks[5], hid_size, 1)            # fc_balance layer 2
    w_self, b_self = _init_linear(ks[6], in_size, out_size)  # fc_self
    w_mlp, b_mlp = _init_linear(ks[7], out_size, out_size)   # relation_mlp[0]
    w_proj, b_proj = _init_linear(ks[8], out_size, out_proj_size)  # Conv1d k=1
    conv = dict(wt_fr=wt_fr, bt_fr=bt_fr, w_fr=w_fr, b_fr=b_fr,
                wt_be=wt_be, bt_be=bt_be, w_be=w_be, b_be=b_be,
                w_b1=w_b1, b_b1=b_b1, w_b2=w_b2, b_b2=b_b2,
                w_self=w_self, b_self=b_self)
    return {"layers": [dict(conv=conv, w_mlp=w_mlp, b_mlp=b_mlp)],
            "w_proj": w_proj, "b_proj": b_proj}


# ----------------------------------------------------------------------------
# Pure-JAX reference (same math; the aggregation operands are quantized to bf16
# exactly like the kernel's MXU path, everything else is f32) for validation.
# ----------------------------------------------------------------------------
def simpmp_reference(A, feats, labels, params):
    bf = lambda x: x.astype(jnp.bfloat16).astype(jnp.float32)
    m0 = (labels == 0).astype(jnp.float32)[:, None]
    m1 = (labels == 1).astype(jnp.float32)[:, None]
    m2 = (labels == 2).astype(jnp.float32)[:, None]
    h = feats
    lp = params["layers"][0]
    p = lp["conv"]
    outs = []
    for r in range(A.shape[0]):
        Aq = bf(A[r])
        nf = Aq @ bf(h * m1)
        nb = Aq @ bf(h * m0)
        nu = Aq @ bf(h * m2)
        t_fr = h @ p["wt_fr"] + p["bt_fr"]
        t_be = h @ p["wt_be"] + p["bt_be"]
        fraud = lambda x: (x * t_fr) @ p["w_fr"] + p["b_fr"]
        benign = lambda x: (x * t_be) @ p["w_be"] + p["b_be"]
        hid = jnp.maximum(h @ p["w_b1"] + p["b_b1"], 0.0)
        bal = jax.nn.sigmoid(hid @ p["w_b2"] + p["b_b2"])
        unk = bal * fraud(nu) + (1.0 - bal) * benign(nu)
        rst = jnp.maximum(h @ p["w_self"] + p["b_self"] + fraud(nf) + benign(nb) + unk, 0.0)
        outs.append(rst)
    agg = sum(outs)                               # relation_agg == 'add'
    hh = agg @ lp["w_mlp"] + lp["b_mlp"]          # last layer -> no ReLU
    return hh @ params["w_proj"] + params["b_proj"]


if __name__ == "__main__":
    # SIMPMP(in_size=16, hid_size=32, out_size=32, num_layers=1, dropout=0, proj=True,
    #        num_relations=3, num_trans=1, out_proj_size=16, agg='mean', relation_agg='add')
    N = 128            # number of graph nodes
    IN_SIZE = 16
    HID_SIZE = 32      # == out_size (hid_size is overwritten by out_size at last layer)
    OUT_SIZE = 32
    OUT_PROJ = 16
    NUM_REL = 3

    key = jax.random.PRNGKey(0)
    k_feat, k_adj, k_lab, k_par = jax.random.split(key, 4)

    feats = jax.random.normal(k_feat, (N, IN_SIZE), jnp.float32)
    A = (jax.random.uniform(k_adj, (NUM_REL, N, N)) < 0.25).astype(jnp.float32)
    labels = jax.random.randint(k_lab, (N,), 0, 3, jnp.int32)   # fake labels in {0,1,2}
    params = init_params(k_par, IN_SIZE, HID_SIZE, OUT_SIZE, OUT_PROJ)

    out = simpmp_forward(A, feats, labels, params)
    out = jax.block_until_ready(out)

    ref = simpmp_reference(A, feats, labels, params)
    err = float(jnp.max(jnp.abs(out - ref)))
    scale = float(jnp.max(jnp.abs(ref))) + 1.0
    assert out.shape == (N, OUT_PROJ), out.shape
    assert err < 1e-2 * scale, f"mismatch: max abs err {err}, scale {scale}"

    print("KERNEL_OK")
</pallas_src>

<mosaic_0001>
module attributes {stable_mosaic.version = 11 : i64} {
  func.func @kernel(%arg0: i32, %arg1: i32, %arg2: memref<1x128x128xbf16, #tpu.memory_space<vmem>>, %arg3: memref<128x48xbf16, #tpu.memory_space<vmem>>, %arg4: memref<128x16xf32, #tpu.memory_space<vmem>>, %arg5: memref<16x96xf32, #tpu.memory_space<vmem>>, %arg6: memref<1x96xf32, #tpu.memory_space<vmem>>, %arg7: memref<32x1xf32, #tpu.memory_space<vmem>>, %arg8: memref<1x1xf32, #tpu.memory_space<vmem>>, %arg9: memref<32x32xf32, #tpu.memory_space<vmem>>, %arg10: memref<1x32xf32, #tpu.memory_space<vmem>>, %arg11: memref<1x32xf32, #tpu.memory_space<vmem>>, %arg12: memref<32x16xf32, #tpu.memory_space<vmem>>, %arg13: memref<1x16xf32, #tpu.memory_space<vmem>>, %arg14: memref<128x16xf32, #tpu.memory_space<vmem>>, %arg15: memref<128x16xf32, #tpu.memory_space<vmem>>, %arg16: memref<128x16xf32, #tpu.memory_space<vmem>>, %arg17: memref<128x1xf32, #tpu.memory_space<vmem>>, %arg18: memref<128x32xf32, #tpu.memory_space<vmem>>, %arg19: memref<128x32xf32, #tpu.memory_space<vmem>>) attributes {dimension_semantics = [#tpu.dimension_semantics<parallel>, #tpu.dimension_semantics<arbitrary>], iteration_bounds = array<i64: 1, 3>, scalar_prefetch = 0 : i64, scratch_operands = 5 : i64, tpu.core_type = #tpu.core_type<tc>, window_params = [{transform_indices = @transform_0, window_bounds = array<i64: 1, 128, 128>}, {pipeline_mode = #tpu.pipeline_mode<synchronous>, transform_indices = @transform_1, window_bounds = array<i64: 128, 48>}, {transform_indices = @transform_2, window_bounds = array<i64: 128, 16>}, {pipeline_mode = #tpu.pipeline_mode<synchronous>, transform_indices = @transform_3, window_bounds = array<i64: 16, 96>}, {pipeline_mode = #tpu.pipeline_mode<synchronous>, transform_indices = @transform_4, window_bounds = array<i64: 1, 96>}, {pipeline_mode = #tpu.pipeline_mode<synchronous>, transform_indices = @transform_5, window_bounds = array<i64: 32, 1>}, {pipeline_mode = #tpu.pipeline_mode<synchronous>, transform_indices = @transform_6, window_bounds = array<i64: 1, 1>}, {pipeline_mode = #tpu.pipeline_mode<synchronous>, transform_indices = @transform_7, window_bounds = array<i64: 32, 32>}, {pipeline_mode = #tpu.pipeline_mode<synchronous>, transform_indices = @transform_8, window_bounds = array<i64: 1, 32>}, {pipeline_mode = #tpu.pipeline_mode<synchronous>, transform_indices = @transform_9, window_bounds = array<i64: 1, 32>}, {pipeline_mode = #tpu.pipeline_mode<synchronous>, transform_indices = @transform_10, window_bounds = array<i64: 32, 16>}, {pipeline_mode = #tpu.pipeline_mode<synchronous>, transform_indices = @transform_11, window_bounds = array<i64: 1, 16>}, {transform_indices = @transform_12, window_bounds = array<i64: 128, 16>}]} {
    %c0_i32 = arith.constant 0 : i32
    %0 = arith.cmpi eq, %arg1, %c0_i32 : i32
    %1 = arith.extui %0 : i1 to i32
    %c0_i32_0 = arith.constant 0 : i32
    %2 = arith.cmpi ne, %1, %c0_i32_0 : i32
    scf.if %2 {
      %c0_29 = arith.constant 0 : index
      %c0_30 = arith.constant 0 : index
      %50 = vector.load %arg4[%c0_29, %c0_30] : memref<128x16xf32, #tpu.memory_space<vmem>>, vector<128x16xf32>
      %c0_31 = arith.constant 0 : index
      %c0_32 = arith.constant 0 : index
      %51 = vector.load %arg5[%c0_31, %c0_32] : memref<16x96xf32, #tpu.memory_space<vmem>>, vector<16x96xf32>
      %cst_33 = arith.constant dense<0.000000e+00> : vector<128x96xf32>
      %52 = tpu.matmul %50, %51, %cst_33 {dimension_numbers = #tpu.dot_dimension_numbers<[1], [0], [0], [1], [0, 0, 1, 1], [], []>} : vector<128x16xf32>, vector<16x96xf32>, vector<128x96xf32> -> vector<128x96xf32>
      %c0_34 = arith.constant 0 : index
      %c0_35 = arith.constant 0 : index
      %53 = vector.load %arg6[%c0_34, %c0_35] : memref<1x96xf32, #tpu.memory_space<vmem>>, vector<1x96xf32>
      %54 = vector.broadcast %53 : vector<1x96xf32> to vector<128x96xf32>
      %55 = arith.addf %52, %54 : vector<128x96xf32>
      %56 = vector.extract_strided_slice %55 {offsets = [0, 0], sizes = [128, 16], strides = [1, 1]} : vector<128x96xf32> to vector<128x16xf32>
      %c0_36 = arith.constant 0 : index
      %c0_37 = arith.constant 0 : index
      %57 = vector.load %arg15[%c0_36, %c0_37] : memref<128x16xf32, #tpu.memory_space<vmem>>, vector<128x16xf32>
      tpu.vector_store %arg15[%c0_36, %c0_37], %56 {strides = array<i32>} : memref<128x16xf32, #tpu.memory_space<vmem>>, vector<128x16xf32>,
      %58 = vector.extract_strided_slice %55 {offsets = [0, 16], sizes = [128, 16], strides = [1, 1]} : vector<128x96xf32> to vector<128x16xf32>
      %c0_38 = arith.constant 0 : index
      %c0_39 = arith.constant 0 : index
      %59 = vector.load %arg16[%c0_38, %c0_39] : memref<128x16xf32, #tpu.memory_space<vmem>>, vector<128x16xf32>
      tpu.vector_store %arg16[%c0_38, %c0_39], %58 {strides = array<i32>} : memref<128x16xf32, #tpu.memory_space<vmem>>, vector<128x16xf32>,
      %60 = vector.extract_strided_slice %55 {offsets = [0, 32], sizes = [128, 32], strides = [1, 1]} : vector<128x96xf32> to vector<128x32xf32>
      %cst_40 = arith.constant 0.000000e+00 : f32
      %61 = vector.broadcast %cst_40 : f32 to vector<128x32xf32>
      %62 = arith.maximumf %60, %61 : vector<128x32xf32>
      %c0_41 = arith.constant 0 : index
      %c0_42 = arith.constant 0 : index
      %63 = vector.load %arg7[%c0_41, %c0_42] : memref<32x1xf32, #tpu.memory_space<vmem>>, vector<32x1xf32>
      %cst_43 = arith.constant dense<0.000000e+00> : vector<128x1xf32>
      %64 = tpu.matmul %62, %63, %cst_43 {dimension_numbers = #tpu.dot_dimension_numbers<[1], [0], [0], [1], [0, 0, 1, 1], [], []>} : vector<128x32xf32>, vector<32x1xf32>, vector<128x1xf32> -> vector<128x1xf32>
      %c0_44 = arith.constant 0 : index
      %c0_45 = arith.constant 0 : index
      %65 = vector.load %arg8[%c0_44, %c0_45] : memref<1x1xf32, #tpu.memory_space<vmem>>, vector<1x1xf32>
      %66 = vector.broadcast %65 : vector<1x1xf32> to vector<128x1xf32>
      %67 = arith.addf %64, %66 : vector<128x1xf32>
      %68 = arith.negf %67 : vector<128x1xf32>
      %69 = math.exp %68 : vector<128x1xf32>
      %cst_46 = arith.constant 1.000000e+00 : f32
      %70 = vector.broadcast %cst_46 : f32 to vector<128x1xf32>
      %71 = arith.addf %70, %69 : vector<128x1xf32>
      %72 = arith.divf %70, %71 : vector<128x1xf32>
      %c0_47 = arith.constant 0 : index
      %c0_48 = arith.constant 0 : index
      %73 = vector.load %arg17[%c0_47, %c0_48] : memref<128x1xf32, #tpu.memory_space<vmem>>, vector<128x1xf32>
      tpu.vector_store %arg17[%c0_47, %c0_48], %72 {strides = array<i32>} : memref<128x1xf32, #tpu.memory_space<vmem>>, vector<128x1xf32>,
      %74 = vector.extract_strided_slice %55 {offsets = [0, 64], sizes = [128, 32], strides = [1, 1]} : vector<128x96xf32> to vector<128x32xf32>
      %c0_49 = arith.constant 0 : index
      %c0_50 = arith.constant 0 : index
      %75 = vector.load %arg18[%c0_49, %c0_50] : memref<128x32xf32, #tpu.memory_space<vmem>>, vector<128x32xf32>
      tpu.vector_store %arg18[%c0_49, %c0_50], %74 {strides = array<i32>} : memref<128x32xf32, #tpu.memory_space<vmem>>, vector<128x32xf32>,
      %cst_51 = arith.constant 0.000000e+00 : f32
      %76 = vector.broadcast %cst_51 : f32 to vector<128x32xf32>
      %c0_52 = arith.constant 0 : index
      %c0_53 = arith.constant 0 : index
      %77 = vector.load %arg19[%c0_52, %c0_53] : memref<128x32xf32, #tpu.memory_space<vmem>>, vector<128x32xf32>
      tpu.vector_store %arg19[%c0_52, %c0_53], %76 {strides = array<i32>} : memref<128x32xf32, #tpu.memory_space<vmem>>, vector<128x32xf32>,
    } else {
    }
    %c0 = arith.constant 0 : index
    %c0_1 = arith.constant 0 : index
    %c0_2 = arith.constant 0 : index
    %3 = vector.load %arg2[%c0, %c0_1, %c0_2] : memref<1x128x128xbf16, #tpu.memory_space<vmem>>, vector<1x128x128xbf16>
    %4 = vector.shape_cast %3 : vector<1x128x128xbf16> to vector<128x128xbf16>
    %c0_3 = arith.constant 0 : index
    %c0_4 = arith.constant 0 : index
    %5 = vector.load %arg3[%c0_3, %c0_4] : memref<128x48xbf16, #tpu.memory_space<vmem>>, vector<128x48xbf16>
    %cst = arith.constant dense<0.000000e+00> : vector<128x48xf32>
    %6 = tpu.matmul %4, %5, %cst {dimension_numbers = #tpu.dot_dimension_numbers<[1], [0], [0], [1], [0, 0, 1, 1], [], []>} : vector<128x128xbf16>, vector<128x48xbf16>, vector<128x48xf32> -> vector<128x48xf32>
    %7 = vector.extract_strided_slice %6 {offsets = [0, 0], sizes = [128, 16], strides = [1, 1]} : vector<128x48xf32> to vector<128x16xf32>
    %8 = vector.extract_strided_slice %6 {offsets = [0, 16], sizes = [128, 16], strides = [1, 1]} : vector<128x48xf32> to vector<128x16xf32>
    %9 = vector.extract_strided_slice %6 {offsets = [0, 32], sizes = [128, 16], strides = [1, 1]} : vector<128x48xf32> to vector<128x16xf32>
    %c0_5 = arith.constant 0 : index
    %c0_6 = arith.constant 0 : index
    %10 = vector.load %arg17[%c0_5, %c0_6] : memref<128x1xf32, #tpu.memory_space<vmem>>, vector<128x1xf32>
    %11 = vector.broadcast %10 : vector<128x1xf32> to vector<128x16xf32>
    %12 = arith.mulf %11, %9 : vector<128x16xf32>
    %13 = arith.addf %7, %12 : vector<128x16xf32>
    %c0_7 = arith.constant 0 : index
    %c0_8 = arith.constant 0 : index
    %14 = vector.load %arg15[%c0_7, %c0_8] : memref<128x16xf32, #tpu.memory_space<vmem>>, vector<128x16xf32>
    %15 = arith.mulf %13, %14 : vector<128x16xf32>
    %cst_9 = arith.constant 1.000000e+00 : f32
    %16 = vector.broadcast %cst_9 : f32 to vector<128x1xf32>
    %17 = arith.subf %16, %10 : vector<128x1xf32>
    %18 = vector.broadcast %17 : vector<128x1xf32> to vector<128x16xf32>
    %19 = arith.mulf %18, %9 : vector<128x16xf32>
    %20 = arith.addf %8, %19 : vector<128x16xf32>
    %c0_10 = arith.constant 0 : index
    %c0_11 = arith.constant 0 : index
    %21 = vector.load %arg16[%c0_10, %c0_11] : memref<128x16xf32, #tpu.memory_space<vmem>>, vector<128x16xf32>
    %22 = arith.mulf %20, %21 : vector<128x16xf32>
    %23 = tpu.concatenate %15, %22 in 1 : vector<128x16xf32>, vector<128x16xf32> -> vector<128x32xf32>
    %c0_12 = arith.constant 0 : index
    %c0_13 = arith.constant 0 : index
    %24 = vector.load %arg9[%c0_12, %c0_13] : memref<32x32xf32, #tpu.memory_space<vmem>>, vector<32x32xf32>
    %cst_14 = arith.constant dense<0.000000e+00> : vector<128x32xf32>
    %25 = tpu.matmul %23, %24, %cst_14 {dimension_numbers = #tpu.dot_dimension_numbers<[1], [0], [0], [1], [0, 0, 1, 1], [], []>} : vector<128x32xf32>, vector<32x32xf32>, vector<128x32xf32> -> vector<128x32xf32>
    %cst_15 = arith.constant 1.000000e+00 : f32
    %26 = vector.broadcast %cst_15 : f32 to vector<128x1xf32>
    %27 = arith.addf %26, %10 : vector<128x1xf32>
    %c0_16 = arith.constant 0 : index
    %c0_17 = arith.constant 0 : index
    %28 = vector.load %arg10[%c0_16, %c0_17] : memref<1x32xf32, #tpu.memory_space<vmem>>, vector<1x32xf32>
    %29 = vector.broadcast %27 : vector<128x1xf32> to vector<128x32xf32>
    %30 = vector.broadcast %28 : vector<1x32xf32> to vector<128x32xf32>
    %31 = arith.mulf %29, %30 : vector<128x32xf32>
    %32 = arith.addf %25, %31 : vector<128x32xf32>
    %cst_18 = arith.constant 2.000000e+00 : f32
    %33 = vector.broadcast %cst_18 : f32 to vector<128x1xf32>
    %34 = arith.subf %33, %10 : vector<128x1xf32>
    %c0_19 = arith.constant 0 : index
    %c0_20 = arith.constant 0 : index
    %35 = vector.load %arg11[%c0_19, %c0_20] : memref<1x32xf32, #tpu.memory_space<vmem>>, vector<1x32xf32>
    %36 = vector.broadcast %34 : vector<128x1xf32> to vector<128x32xf32>
    %37 = vector.broadcast %35 : vector<1x32xf32> to vector<128x32xf32>
    %38 = arith.mulf %36, %37 : vector<128x32xf32>
    %39 = arith.addf %32, %38 : vector<128x32xf32>
    %c0_21 = arith.constant 0 : index
    %c0_22 = arith.constant 0 : index
    %40 = vector.load %arg19[%c0_21, %c0_22] : memref<128x32xf32, #tpu.memory_space<vmem>>, vector<128x32xf32>
    %c0_23 = arith.constant 0 : index
    %c0_24 = arith.constant 0 : index
    %41 = vector.load %arg18[%c0_23, %c0_24] : memref<128x32xf32, #tpu.memory_space<vmem>>, vector<128x32xf32>
    %42 = arith.addf %41, %39 : vector<128x32xf32>
    %cst_25 = arith.constant 0.000000e+00 : f32
    %43 = vector.broadcast %cst_25 : f32 to vector<128x32xf32>
    %44 = arith.maximumf %42, %43 : vector<128x32xf32>
    %45 = arith.addf %40, %44 : vector<128x32xf32>
    %c0_26 = arith.constant 0 : index
    %c0_27 = arith.constant 0 : index
    %46 = vector.load %arg19[%c0_26, %c0_27] : memref<128x32xf32, #tpu.memory_space<vmem>>, vector<128x32xf32>
    tpu.vector_store %arg19[%c0_26, %c0_27], %45 {strides = array<i32>} : memref<128x32xf32, #tpu.memory_space<vmem>>, vector<128x32xf32>,
    %c2_i32 = arith.constant 2 : i32
    %47 = arith.cmpi eq, %arg1, %c2_i32 : i32
    %48 = arith.extui %47 : i1 to i32
    %c0_i32_28 = arith.constant 0 : i32
    %49 = arith.cmpi ne, %48, %c0_i32_28 : i32
    scf.if %49 {
      %c0_29 = arith.constant 0 : index
      %c0_30 = arith.constant 0 : index
      %50 = vector.load %arg19[%c0_29, %c0_30] : memref<128x32xf32, #tpu.memory_space<vmem>>, vector<128x32xf32>
      %c0_31 = arith.constant 0 : index
      %c0_32 = arith.constant 0 : index
      %51 = vector.load %arg12[%c0_31, %c0_32] : memref<32x16xf32, #tpu.memory_space<vmem>>, vector<32x16xf32>
      %cst_33 = arith.constant dense<0.000000e+00> : vector<128x16xf32>
      %52 = tpu.matmul %50, %51, %cst_33 {dimension_numbers = #tpu.dot_dimension_numbers<[1], [0], [0], [1], [0, 0, 1, 1], [], []>} : vector<128x32xf32>, vector<32x16xf32>, vector<128x16xf32> -> vector<128x16xf32>
      %c0_34 = arith.constant 0 : index
      %c0_35 = arith.constant 0 : index
      %53 = vector.load %arg13[%c0_34, %c0_35] : memref<1x16xf32, #tpu.memory_space<vmem>>, vector<1x16xf32>
      %54 = vector.broadcast %53 : vector<1x16xf32> to vector<128x16xf32>
      %55 = arith.addf %52, %54 : vector<128x16xf32>
      %c0_36 = arith.constant 0 : index
      %c0_37 = arith.constant 0 : index
      %56 = vector.load %arg14[%c0_36, %c0_37] : memref<128x16xf32, #tpu.memory_space<vmem>>, vector<128x16xf32>
      tpu.vector_store %arg14[%c0_36, %c0_37], %55 {strides = array<i32>} : memref<128x16xf32, #tpu.memory_space<vmem>>, vector<128x16xf32>,
    } else {
    }
    return
  }
  func.func @transform_0(%arg0: i32, %arg1: i32) -> (i32, i32, i32) {
    %c0_i32 = arith.constant 0 : i32
    %c0_i32_0 = arith.constant 0 : i32
    return %arg1, %arg0, %c0_i32 : i32, i32, i32
  }
  func.func @transform_1(%arg0: i32, %arg1: i32) -> (i32, i32) {
    %c0_i32 = arith.constant 0 : i32
    %c0_i32_0 = arith.constant 0 : i32
    %c0_i32_1 = arith.constant 0 : i32
    return %c0_i32, %c0_i32_0 : i32, i32
  }
  func.func @transform_2(%arg0: i32, %arg1: i32) -> (i32, i32) {
    %c0_i32 = arith.constant 0 : i32
    %c0_i32_0 = arith.constant 0 : i32
    return %arg0, %c0_i32 : i32, i32
  }
  func.func @transform_3(%arg0: i32, %arg1: i32) -> (i32, i32) {
    %c0_i32 = arith.constant 0 : i32
    %c0_i32_0 = arith.constant 0 : i32
    %c0_i32_1 = arith.constant 0 : i32
    return %c0_i32, %c0_i32_0 : i32, i32
  }
  func.func @transform_4(%arg0: i32, %arg1: i32) -> (i32, i32) {
    %c0_i32 = arith.constant 0 : i32
    %c0_i32_0 = arith.constant 0 : i32
    %c0_i32_1 = arith.constant 0 : i32
    return %c0_i32, %c0_i32_0 : i32, i32
  }
  func.func @transform_5(%arg0: i32, %arg1: i32) -> (i32, i32) {
    %c0_i32 = arith.constant 0 : i32
    %c0_i32_0 = arith.constant 0 : i32
    %c0_i32_1 = arith.constant 0 : i32
    return %c0_i32, %c0_i32_0 : i32, i32
  }
  func.func @transform_6(%arg0: i32, %arg1: i32) -> (i32, i32) {
    %c0_i32 = arith.constant 0 : i32
    %c0_i32_0 = arith.constant 0 : i32
    %c0_i32_1 = arith.constant 0 : i32
    return %c0_i32, %c0_i32_0 : i32, i32
  }
  func.func @transform_7(%arg0: i32, %arg1: i32) -> (i32, i32) {
    %c0_i32 = arith.constant 0 : i32
    %c0_i32_0 = arith.constant 0 : i32
    %c0_i32_1 = arith.constant 0 : i32
    return %c0_i32, %c0_i32_0 : i32, i32
  }
  func.func @transform_8(%arg0: i32, %arg1: i32) -> (i32, i32) {
    %c0_i32 = arith.constant 0 : i32
    %c0_i32_0 = arith.constant 0 : i32
    %c0_i32_1 = arith.constant 0 : i32
    return %c0_i32, %c0_i32_0 : i32, i32
  }
  func.func @transform_9(%arg0: i32, %arg1: i32) -> (i32, i32) {
    %c0_i32 = arith.constant 0 : i32
    %c0_i32_0 = arith.constant 0 : i32
    %c0_i32_1 = arith.constant 0 : i32
    return %c0_i32, %c0_i32_0 : i32, i32
  }
  func.func @transform_10(%arg0: i32, %arg1: i32) -> (i32, i32) {
    %c0_i32 = arith.constant 0 : i32
    %c0_i32_0 = arith.constant 0 : i32
    %c0_i32_1 = arith.constant 0 : i32
    return %c0_i32, %c0_i32_0 : i32, i32
  }
  func.func @transform_11(%arg0: i32, %arg1: i32) -> (i32, i32) {
    %c0_i32 = arith.constant 0 : i32
    %c0_i32_0 = arith.constant 0 : i32
    %c0_i32_1 = arith.constant 0 : i32
    return %c0_i32, %c0_i32_0 : i32, i32
  }
  func.func @transform_12(%arg0: i32, %arg1: i32) -> (i32, i32) {
    %c0_i32 = arith.constant 0 : i32
    %c0_i32_0 = arith.constant 0 : i32
    return %arg0, %c0_i32 : i32, i32
  }
}

</mosaic_0001>

<llo_original>
// kernel: tpu_custom_call.1
$region0: #{tpu_custom_call.1}
  #allocation0 [shape = 'u32[]', space=smem, size = 0x4, offset = 0x4, fixed_abs, tag = 'smem constant byte address 0x4 - core index']
  #allocation1 [shape = 'u32[144,128]{1,0:T(1,128)}', space=vmem, size = 0x12000, scoped, tag = 'internal scratch']
  #allocation2 [shape = 'f32[128,16]{1,0:T(8,128)}', space=vmem, size = 0x10000, scoped, tag = 'scratch operand']
  #allocation3 [shape = 'f32[128,16]{1,0:T(8,128)}', space=vmem, size = 0x10000, scoped, tag = 'scratch operand']
  #allocation4 [shape = 'f32[128,1]{1,0:T(8,128)}', space=vmem, size = 0x10000, scoped, tag = 'scratch operand']
  #allocation5 [shape = 'f32[128,32]{1,0:T(8,128)}', space=vmem, size = 0x10000, scoped, tag = 'scratch operand']
  #allocation6 [shape = 'f32[128,32]{1,0:T(8,128)}', space=vmem, size = 0x10000, scoped, tag = 'scratch operand']
  #allocation7 [shape = 'f32[1,1]{1,0:T(1,128)S(1)}', space=vmem, size = 0x200, scoped, tag = 'scoped memory for tpu_custom_call.1']
  %s0 = inlined_call_operand.vmem [shape: bf16[3,128,128], index: 0, kind: input, shape index: {}]
  %s1 = inlined_call_operand.vmem [shape: bf16[128,48], index: 1, kind: input, shape index: {}]
  %s2 = inlined_call_operand.vmem [shape: f32[128,16], index: 2, kind: input, shape index: {}]
  %s3 = inlined_call_operand.vmem [shape: f32[16,96], index: 3, kind: input, shape index: {}]
  %s4 = inlined_call_operand.vmem [shape: f32[1,96], index: 4, kind: input, shape index: {}]
  %s5 = inlined_call_operand.vmem [shape: f32[32,1], index: 5, kind: input, shape index: {}]
  %s6 = inlined_call_operand.<no memory space> [shape: f32[1,1], index: 6, kind: input, shape index: {}]
  %s7 = inlined_call_operand.vmem [shape: f32[32,32], index: 7, kind: input, shape index: {}]
  %s8 = inlined_call_operand.vmem [shape: f32[1,32], index: 8, kind: input, shape index: {}]
  %s9 = inlined_call_operand.vmem [shape: f32[1,32], index: 9, kind: input, shape index: {}]
  %s10 = inlined_call_operand.vmem [shape: f32[32,16], index: 10, kind: input, shape index: {}]
  %s11 = inlined_call_operand.vmem [shape: f32[1,16], index: 11, kind: input, shape index: {}]
  %s12 = inlined_call_operand.vmem [shape: f32[128,16], index: 12, kind: output, shape index: {}]
  %s13 = sld [smem:[#allocation0]]
  $region89: #{tpu_custom_call.1} parent=0
    _
  %s15 = ssub.s32 1, %s13
  %s16 = scalar_select 0, %s15, %s13
  %v17 = vstv %s6
  %18 = vst [vmem:[#allocation7] sm:$0x1] %v17
  loop: start=0, step=1, limit=5
  $region2: #{tpu_custom_call.1} parent=0 // loop_pre_header
    _
  $region3: #{tpu_custom_call.1} parent=0 // loop_header
    %s20 = sphi 0, %s24
    %p21 = scmp.ge.s32.totalorder %s20, 5
    %s27 = sphi 0, %s39
    %s28 = sphi 0, %s35
    %s29 = sphi 0, %s27
    %s30 = sphi 0, %s28
    %s31 = sphi 0, %s29
    %s32 = sphi 0, %s30
    %s44 = sphi 0, %s46
    %s47 = sphi 0, %s44
    %s48 = sphi 0, %s47
    %s64 = sphi 0, %s48
    %s68 = sphi 0, %s68
    %s70 = sphi 0, %s68
    %s71 = sphi 0, %s70
    %s85 = sphi 0, %s71
    %s91 = sphi 0, %s93
    %s94 = sphi 0, %s91
    %s95 = sphi 0, %s94
    %s111 = sphi 0, %s95
    %s115 = sphi 0, %s115
    %s117 = sphi 0, %s115
    %s118 = sphi 0, %s117
    %s132 = sphi 0, %s118
    %s136 = sphi 0, %s136
    %s138 = sphi 0, %s136
    %s139 = sphi 0, %s138
    %s153 = sphi 0, %s139
    %s157 = sphi 0, %s157
    %s159 = sphi 0, %s157
    %s160 = sphi 0, %s159
    %s174 = sphi 0, %s160
    %s178 = sphi 0, %s178
    %s180 = sphi 0, %s178
    %s181 = sphi 0, %s180
    %s195 = sphi 0, %s181
    %s199 = sphi 0, %s199
    %s201 = sphi 0, %s199
    %s202 = sphi 0, %s201
    %s216 = sphi 0, %s202
    %s220 = sphi 0, %s220
    %s222 = sphi 0, %s220
    %s223 = sphi 0, %s222
    %s237 = sphi 0, %s223
    %s241 = sphi 0, %s241
    %s243 = sphi 0, %s241
    %s244 = sphi 0, %s243
    %s258 = sphi 0, %s244
    %s262 = sphi 0, %s262
    %s264 = sphi 0, %s262
    %s265 = sphi 0, %s264
    %s279 = sphi 0, %s265
    %s283 = sphi 0, %s283
    %s285 = sphi 0, %s283
    %s286 = sphi 0, %s285
    %s300 = sphi 0, %s286
    %s306 = sphi 0, %s308
    %s309 = sphi 0, %s306
    %s310 = sphi 0, %s309
    %s326 = sphi 0, %s310
  $region4: #{tpu_custom_call.1} parent=0 // loop_header_branch
    %23 = sbr.rel (%p21) target = $region8
  $region5: #{tpu_custom_call.1} parent=0 // loop_body
    %s25 = ssub.s32 %s20, 1
    %s26 = ssub.s32 %s20, 2
    %s33 = sadd.s32 1, %s28
    %p34 = scmp.ge.s32.totalorder %s33, 3
    %s35 = scalar_select %p34, 0, %s33
    %s36 = sadd.s32 1, %s27
    %s37 = scalar_select %p34, %s36, %s27
    %p38 = scmp.ge.s32.totalorder %s37, 1
    %s39 = scalar_select %p38, 0, %s37
    %s40 = ssub.s32 %s28, %s35
    %s41 = ssub.s32 %s27, %s39
    %s42 = sor.u32 %s40, %s41
    %p43 = scmp.eq.s32.totalorder %s42, 0
    %s45 = sadd.s32 %s44, 1
    %s46 = scalar_select %p43, %s44, %s45
    %p49 = pneg %p43
    %p50 = scmp.eq.s32.totalorder %s20, 2
    %p51 = por %p49, %p50
    %p52 = scmp.ne.s32.totalorder %s44, %s47
    %p53 = scmp.eq.s32.totalorder %s20, 0
    %p54 = por %p52, %p53
    %p55 = scmp.ne.s32.totalorder %s44, %s47
    %p56 = scmp.eq.s32.totalorder %s25, 2
    %p57 = por %p55, %p56
    %p58 = scmp.ne.s32.totalorder %s47, %s48
    %p59 = scmp.eq.s32.totalorder %s25, 0
    %p60 = por %p58, %p59
    %p61 = scmp.ne.s32.totalorder %s47, %s48
    %p62 = scmp.eq.s32.totalorder %s26, 2
    %p63 = por %p61, %p62
    %p65 = scmp.ne.s32.totalorder %s48, %s64
    %p66 = scmp.eq.s32.totalorder %s26, 0
    %p67 = por %p65, %p66
    %s69 = sadd.s32 %s68, 1
    %p72 = scmp.eq.s32.totalorder %s20, 2
    %p73 = scmp.ne.s32.totalorder %s68, %s70
    %p74 = scmp.eq.s32.totalorder %s20, 0
    %p75 = por %p73, %p74
    %p76 = scmp.ne.s32.totalorder %s68, %s70
    %p77 = scmp.eq.s32.totalorder %s25, 2
    %p78 = por %p76, %p77
    %p79 = scmp.ne.s32.totalorder %s70, %s71
    %p80 = scmp.eq.s32.totalorder %s25, 0
    %p81 = por %p79, %p80
    %p82 = scmp.ne.s32.totalorder %s70, %s71
    %p83 = scmp.eq.s32.totalorder %s26, 2
    %p84 = por %p82, %p83
    %p86 = scmp.ne.s32.totalorder %s71, %s85
    %p87 = scmp.eq.s32.totalorder %s26, 0
    %p88 = por %p86, %p87
    %s89 = ssub.s32 %s27, %s39
    %p90 = scmp.eq.s32.totalorder %s89, 0
    %s92 = sadd.s32 %s91, 1
    %s93 = scalar_select %p90, %s91, %s92
    %p96 = pneg %p90
    %p97 = scmp.eq.s32.totalorder %s20, 2
    %p98 = por %p96, %p97
    %p99 = scmp.ne.s32.totalorder %s91, %s94
    %p100 = scmp.eq.s32.totalorder %s20, 0
    %p101 = por %p99, %p100
    %p102 = scmp.ne.s32.totalorder %s91, %s94
    %p103 = scmp.eq.s32.totalorder %s25, 2
    %p104 = por %p102, %p103
    %p105 = scmp.ne.s32.totalorder %s94, %s95
    %p106 = scmp.eq.s32.totalorder %s25, 0
    %p107 = por %p105, %p106
    %p108 = scmp.ne.s32.totalorder %s94, %s95
    %p109 = scmp.eq.s32.totalorder %s26, 2
    %p110 = por %p108, %p109
    %p112 = scmp.ne.s32.totalorder %s95, %s111
    %p113 = scmp.eq.s32.totalorder %s26, 0
    %p114 = por %p112, %p113
    %s116 = sadd.s32 %s115, 1
    %p119 = scmp.eq.s32.totalorder %s20, 2
    %p120 = scmp.ne.s32.totalorder %s115, %s117
    %p121 = scmp.eq.s32.totalorder %s20, 0
    %p122 = por %p120, %p121
    %p123 = scmp.ne.s32.totalorder %s115, %s117
    %p124 = scmp.eq.s32.totalorder %s25, 2
    %p125 = por %p123, %p124
    %p126 = scmp.ne.s32.totalorder %s117, %s118
    %p127 = scmp.eq.s32.totalorder %s25, 0
    %p128 = por %p126, %p127
    %p129 = scmp.ne.s32.totalorder %s117, %s118
    %p130 = scmp.eq.s32.totalorder %s26, 2
    %p131 = por %p129, %p130
    %p133 = scmp.ne.s32.totalorder %s118, %s132
    %p134 = scmp.eq.s32.totalorder %s26, 0
    %p135 = por %p133, %p134
    %s137 = sadd.s32 %s136, 1
    %p140 = scmp.eq.s32.totalorder %s20, 2
    %p141 = scmp.ne.s32.totalorder %s136, %s138
    %p142 = scmp.eq.s32.totalorder %s20, 0
    %p143 = por %p141, %p142
    %p144 = scmp.ne.s32.totalorder %s136, %s138
    %p145 = scmp.eq.s32.totalorder %s25, 2
    %p146 = por %p144, %p145
    %p147 = scmp.ne.s32.totalorder %s138, %s139
    %p148 = scmp.eq.s32.totalorder %s25, 0
    %p149 = por %p147, %p148
    %p150 = scmp.ne.s32.totalorder %s138, %s139
    %p151 = scmp.eq.s32.totalorder %s26, 2
    %p152 = por %p150, %p151
    %p154 = scmp.ne.s32.totalorder %s139, %s153
    %p155 = scmp.eq.s32.totalorder %s26, 0
    %p156 = por %p154, %p155
    %s158 = sadd.s32 %s157, 1
    %p161 = scmp.eq.s32.totalorder %s20, 2
    %p162 = scmp.ne.s32.totalorder %s157, %s159
    %p163 = scmp.eq.s32.totalorder %s20, 0
    %p164 = por %p162, %p163
    %p165 = scmp.ne.s32.totalorder %s157, %s159
    %p166 = scmp.eq.s32.totalorder %s25, 2
    %p167 = por %p165, %p166
    %p168 = scmp.ne.s32.totalorder %s159, %s160
    %p169 = scmp.eq.s32.totalorder %s25, 0
    %p170 = por %p168, %p169
    %p171 = scmp.ne.s32.totalorder %s159, %s160
    %p172 = scmp.eq.s32.totalorder %s26, 2
    %p173 = por %p171, %p172
    %p175 = scmp.ne.s32.totalorder %s160, %s174
    %p176 = scmp.eq.s32.totalorder %s26, 0
    %p177 = por %p175, %p176
    %s179 = sadd.s32 %s178, 1
    %p182 = scmp.eq.s32.totalorder %s20, 2
    %p183 = scmp.ne.s32.totalorder %s178, %s180
    %p184 = scmp.eq.s32.totalorder %s20, 0
    %p185 = por %p183, %p184
    %p186 = scmp.ne.s32.totalorder %s178, %s180
    %p187 = scmp.eq.s32.totalorder %s25, 2
    %p188 = por %p186, %p187
    %p189 = scmp.ne.s32.totalorder %s180, %s181
    %p190 = scmp.eq.s32.totalorder %s25, 0
    %p191 = por %p189, %p190
    %p192 = scmp.ne.s32.totalorder %s180, %s181
    %p193 = scmp.eq.s32.totalorder %s26, 2
    %p194 = por %p192, %p193
    %p196 = scmp.ne.s32.totalorder %s181, %s195
    %p197 = scmp.eq.s32.totalorder %s26, 0
    %p198 = por %p196, %p197
    %s200 = sadd.s32 %s199, 1
    %p203 = scmp.eq.s32.totalorder %s20, 2
    %p204 = scmp.ne.s32.totalorder %s199, %s201
    %p205 = scmp.eq.s32.totalorder %s20, 0
    %p206 = por %p204, %p205
    %p207 = scmp.ne.s32.totalorder %s199, %s201
    %p208 = scmp.eq.s32.totalorder %s25, 2
    %p209 = por %p207, %p208
    %p210 = scmp.ne.s32.totalorder %s201, %s202
    %p211 = scmp.eq.s32.totalorder %s25, 0
    %p212 = por %p210, %p211
    %p213 = scmp.ne.s32.totalorder %s201, %s202
    %p214 = scmp.eq.s32.totalorder %s26, 2
    %p215 = por %p213, %p214
    %p217 = scmp.ne.s32.totalorder %s202, %s216
    %p218 = scmp.eq.s32.totalorder %s26, 0
    %p219 = por %p217, %p218
    %s221 = sadd.s32 %s220, 1
    %p224 = scmp.eq.s32.totalorder %s20, 2
    %p225 = scmp.ne.s32.totalorder %s220, %s222
    %p226 = scmp.eq.s32.totalorder %s20, 0
    %p227 = por %p225, %p226
    %p228 = scmp.ne.s32.totalorder %s220, %s222
    %p229 = scmp.eq.s32.totalorder %s25, 2
    %p230 = por %p228, %p229
    %p231 = scmp.ne.s32.totalorder %s222, %s223
    %p232 = scmp.eq.s32.totalorder %s25, 0
    %p233 = por %p231, %p232
    %p234 = scmp.ne.s32.totalorder %s222, %s223
    %p235 = scmp.eq.s32.totalorder %s26, 2
    %p236 = por %p234, %p235
    %p238 = scmp.ne.s32.totalorder %s223, %s237
    %p239 = scmp.eq.s32.totalorder %s26, 0
    %p240 = por %p238, %p239
    %s242 = sadd.s32 %s241, 1
    %p245 = scmp.eq.s32.totalorder %s20, 2
    %p246 = scmp.ne.s32.totalorder %s241, %s243
    %p247 = scmp.eq.s32.totalorder %s20, 0
    %p248 = por %p246, %p247
    %p249 = scmp.ne.s32.totalorder %s241, %s243
    %p250 = scmp.eq.s32.totalorder %s25, 2
    %p251 = por %p249, %p250
    %p252 = scmp.ne.s32.totalorder %s243, %s244
    %p253 = scmp.eq.s32.totalorder %s25, 0
    %p254 = por %p252, %p253
    %p255 = scmp.ne.s32.totalorder %s243, %s244
    %p256 = scmp.eq.s32.totalorder %s26, 2
    %p257 = por %p255, %p256
    %p259 = scmp.ne.s32.totalorder %s244, %s258
    %p260 = scmp.eq.s32.totalorder %s26, 0
    %p261 = por %p259, %p260
    %s263 = sadd.s32 %s262, 1
    %p266 = scmp.eq.s32.totalorder %s20, 2
    %p267 = scmp.ne.s32.totalorder %s262, %s264
    %p268 = scmp.eq.s32.totalorder %s20, 0
    %p269 = por %p267, %p268
    %p270 = scmp.ne.s32.totalorder %s262, %s264
    %p271 = scmp.eq.s32.totalorder %s25, 2
    %p272 = por %p270, %p271
    %p273 = scmp.ne.s32.totalorder %s264, %s265
    %p274 = scmp.eq.s32.totalorder %s25, 0
    %p275 = por %p273, %p274
    %p276 = scmp.ne.s32.totalorder %s264, %s265
    %p277 = scmp.eq.s32.totalorder %s26, 2
    %p278 = por %p276, %p277
    %p280 = scmp.ne.s32.totalorder %s265, %s279
    %p281 = scmp.eq.s32.totalorder %s26, 0
    %p282 = por %p280, %p281
    %s284 = sadd.s32 %s283, 1
    %p287 = scmp.eq.s32.totalorder %s20, 2
    %p288 = scmp.ne.s32.totalorder %s283, %s285
    %p289 = scmp.eq.s32.totalorder %s20, 0
    %p290 = por %p288, %p289
    %p291 = scmp.ne.s32.totalorder %s283, %s285
    %p292 = scmp.eq.s32.totalorder %s25, 2
    %p293 = por %p291, %p292
    %p294 = scmp.ne.s32.totalorder %s285, %s286
    %p295 = scmp.eq.s32.totalorder %s25, 0
    %p296 = por %p294, %p295
    %p297 = scmp.ne.s32.totalorder %s285, %s286
    %p298 = scmp.eq.s32.totalorder %s26, 2
    %p299 = por %p297, %p298
    %p301 = scmp.ne.s32.totalorder %s286, %s300
    %p302 = scmp.eq.s32.totalorder %s26, 0
    %p303 = por %p301, %p302
    %s304 = ssub.s32 %s27, %s39
    %p305 = scmp.eq.s32.totalorder %s304, 0
    %s307 = sadd.s32 %s306, 1
    %s308 = scalar_select %p305, %s306, %s307
    %p311 = pneg %p305
    %p312 = scmp.eq.s32.totalorder %s20, 2
    %p313 = por %p311, %p312
    %p314 = scmp.ne.s32.totalorder %s306, %s309
    %p315 = scmp.eq.s32.totalorder %s20, 0
    %p316 = por %p314, %p315
    %p317 = scmp.ne.s32.totalorder %s306, %s309
    %p318 = scmp.eq.s32.totalorder %s25, 2
    %p319 = por %p317, %p318
    %p320 = scmp.ne.s32.totalorder %s309, %s310
    %p321 = scmp.eq.s32.totalorder %s25, 0
    %p322 = por %p320, %p321
    %p323 = scmp.ne.s32.totalorder %s309, %s310
    %p324 = scmp.eq.s32.totalorder %s26, 2
    %p325 = por %p323, %p324
    %p327 = scmp.ne.s32.totalorder %s310, %s326
    %p328 = scmp.eq.s32.totalorder %s26, 0
    %p329 = por %p327, %p328
    %p330 = scmp.le.s32.totalorder 1, %s20
    %p331 = scmp.lt.s32.totalorder %s20, 4
    %p332 = pnand %p330, %p331
    %p333 = pneg %p332
    // Predicated region
    $region9: #{tpu_custom_call.1} parent=5 // pred_check
      _
    $region10: #{tpu_custom_call.1} parent=5 // pred_check_branch
      %335 = sbr.rel (%p332) target = $region12
    $region11: #{tpu_custom_call.1} parent=5 // pred_region
      %s336 = ssub.s32 %s20, 1
      // Predicated region
      $region13: #{tpu_custom_call.1} parent=11 // pred_check
        %p337 = pneg %p81
      $region14: #{tpu_custom_call.1} parent=11 // pred_check_branch
        %339 = sbr.rel (%p337) target = $region16
      $region15: #{tpu_custom_call.1} parent=11 // pred_region
        _
      $region16: #{tpu_custom_call.1} parent=11 // pred_fallthru
        _
      // Predicated region
      $region17: #{tpu_custom_call.1} parent=11 // pred_check
        %p340 = pneg %p107
      $region18: #{tpu_custom_call.1} parent=11 // pred_check_branch
        %342 = sbr.rel (%p340) target = $region20
      $region19: #{tpu_custom_call.1} parent=11 // pred_region
        %s343 = smul.u32 16, %s29
        %p344 = scmp.lt.s32.totalorder %s343, 15
        %s345 = scalar_select %p344, %s343, 15
        %s346 = smul.addr %s345, 8
        %s347 = scalar_lea.vmem %s2, %s346
        %s348 = smul.u32 16, %s29
      $region20: #{tpu_custom_call.1} parent=11 // pred_fallthru
        _
      // Predicated region
      $region21: #{tpu_custom_call.1} parent=11 // pred_check
        %p349 = pneg %p128
      $region22: #{tpu_custom_call.1} parent=11 // pred_check_branch
        %351 = sbr.rel (%p349) target = $region24
      $region23: #{tpu_custom_call.1} parent=11 // pred_region
        _
      $region24: #{tpu_custom_call.1} parent=11 // pred_fallthru
        _
      // Predicated region
      $region25: #{tpu_custom_call.1} parent=11 // pred_check
        %p352 = pneg %p149
      $region26: #{tpu_custom_call.1} parent=11 // pred_check_branch
        %354 = sbr.rel (%p352) target = $region28
      $region27: #{tpu_custom_call.1} parent=11 // pred_region
        _
      $region28: #{tpu_custom_call.1} parent=11 // pred_fallthru
        _
      // Predicated region
      $region29: #{tpu_custom_call.1} parent=11 // pred_check
        %p355 = pneg %p170
      $region30: #{tpu_custom_call.1} parent=11 // pred_check_branch
        %357 = sbr.rel (%p355) target = $region32
      $region31: #{tpu_custom_call.1} parent=11 // pred_region
        _
      $region32: #{tpu_custom_call.1} parent=11 // pred_fallthru
        _
      // Predicated region
      $region33: #{tpu_custom_call.1} parent=11 // pred_check
        %p358 = pneg %p191
      $region34: #{tpu_custom_call.1} parent=11 // pred_check_branch
        %360 = sbr.rel (%p358) target = $region36
      $region35: #{tpu_custom_call.1} parent=11 // pred_region
        _
      $region36: #{tpu_custom_call.1} parent=11 // pred_fallthru
        _
      // Predicated region
      $region37: #{tpu_custom_call.1} parent=11 // pred_check
        %p361 = pneg %p212
      $region38: #{tpu_custom_call.1} parent=11 // pred_check_branch
        %363 = sbr.rel (%p361) target = $region40
      $region39: #{tpu_custom_call.1} parent=11 // pred_region
        _
      $region40: #{tpu_custom_call.1} parent=11 // pred_fallthru
        _
      // Predicated region
      $region41: #{tpu_custom_call.1} parent=11 // pred_check
        %p364 = pneg %p233
      $region42: #{tpu_custom_call.1} parent=11 // pred_check_branch
        %366 = sbr.rel (%p364) target = $region44
      $region43: #{tpu_custom_call.1} parent=11 // pred_region
        _
      $region44: #{tpu_custom_call.1} parent=11 // pred_fallthru
        _
      // Predicated region
      $region45: #{tpu_custom_call.1} parent=11 // pred_check
        %p367 = pneg %p254
      $region46: #{tpu_custom_call.1} parent=11 // pred_check_branch
        %369 = sbr.rel (%p367) target = $region48
      $region47: #{tpu_custom_call.1} parent=11 // pred_region
        _
      $region48: #{tpu_custom_call.1} parent=11 // pred_fallthru
        _
      // Predicated region
      $region49: #{tpu_custom_call.1} parent=11 // pred_check
        %p370 = pneg %p275
      $region50: #{tpu_custom_call.1} parent=11 // pred_check_branch
        %372 = sbr.rel (%p370) target = $region52
      $region51: #{tpu_custom_call.1} parent=11 // pred_region
        _
      $region52: #{tpu_custom_call.1} parent=11 // pred_fallthru
        _
      // Predicated region
      $region53: #{tpu_custom_call.1} parent=11 // pred_check
        %p373 = pneg %p296
      $region54: #{tpu_custom_call.1} parent=11 // pred_check_branch
        %375 = sbr.rel (%p373) target = $region56
      $region55: #{tpu_custom_call.1} parent=11 // pred_region
        _
      $region56: #{tpu_custom_call.1} parent=11 // pred_fallthru
        _
    $region12: #{tpu_custom_call.1} parent=5 // pred_fallthru
      _
    %p376 = scmp.lt.s32.totalorder %s20, 3
    // Predicated region
    $region57: #{tpu_custom_call.1} parent=5 // pred_check
      %p377 = pneg %p376
    $region58: #{tpu_custom_call.1} parent=5 // pred_check_branch
      %379 = sbr.rel (%p377) target = $region60
    $region59: #{tpu_custom_call.1} parent=5 // pred_region
      // Predicated region
      $region61: #{tpu_custom_call.1} parent=59 // pred_check
        %p380 = pneg %p54
      $region62: #{tpu_custom_call.1} parent=59 // pred_check_branch
        %382 = sbr.rel (%p380) target = $region64
      $region63: #{tpu_custom_call.1} parent=59 // pred_region
        %s383 = smul.u32 16, %s27
        %p384 = scmp.lt.s32.totalorder %s28, 2
        %s385 = scalar_select %p384, %s28, 2
        %p386 = scmp.lt.s32.totalorder %s383, 15
        %s387 = scalar_select %p386, %s383, 15
        %s388 = smul.addr %s385, 16
        %s389 = sadd.s32 %s387, %s388
        %s390 = smul.addr %s389, 4
        %s391 = scalar_lea.vmem %s0, %s390
        %s392 = smul.u32 16, %s27
      $region64: #{tpu_custom_call.1} parent=59 // pred_fallthru
        _
    $region60: #{tpu_custom_call.1} parent=5 // pred_fallthru
      _
    %p393 = scmp.le.s32.totalorder 1, %s20
    %p394 = scmp.lt.s32.totalorder %s20, 4
    %p395 = pnand %p393, %p394
    %p396 = pneg %p395
    // Predicated region
    $region65: #{tpu_custom_call.1} parent=5 // pred_check
      _
    $region66: #{tpu_custom_call.1} parent=5 // pred_check_branch
      %398 = sbr.rel (%p395) target = $region68
    $region67: #{tpu_custom_call.1} parent=5 // pred_region
      %s399 = ssub.s32 %s20, 1
      %s400 = smul.u32 16, %s29
      %p401 = scmp.lt.s32.totalorder %s30, 2
      %s402 = scalar_select %p401, %s30, 2
      %p403 = scmp.lt.s32.totalorder %s400, 15
      %s404 = scalar_select %p403, %s400, 15
      %s405 = smul.addr %s402, 16
      %s406 = sadd.s32 %s404, %s405
      %s407 = smul.addr %s406, 4
      %s408 = scalar_lea.vmem %s0, %s407
      %p409 = pneg %p60
      %p410 = pneg %p57
      %p411 = pneg %p81
      %p412 = pneg %p78
      %s413 = smul.u32 16, %s29
      %p414 = scmp.lt.s32.totalorder %s413, 15
      %s415 = scalar_select %p414, %s413, 15
      %s416 = smul.addr %s415, 8
      %s417 = scalar_lea.vmem %s2, %s416
      %p418 = pneg %p107
      %p419 = pneg %p104
      %p420 = pneg %p128
      %p421 = pneg %p125
      %p422 = pneg %p149
      %p423 = pneg %p146
      %p424 = pneg %p170
      %p425 = pneg %p167
      %p426 = pneg %p191
      %p427 = pneg %p188
      %p428 = pneg %p212
      %p429 = pneg %p209
      %p430 = pneg %p233
      %p431 = pneg %p230
      %p432 = pneg %p254
      %p433 = pneg %p251
      %p434 = pneg %p275
      %p435 = pneg %p272
      %p436 = pneg %p296
      %p437 = pneg %p293
      %p438 = pneg %p322
      %p439 = pneg %p319
      %s440 = smul.u32 16, %s29
      %p441 = scmp.lt.s32.totalorder %s440, 15
      %s442 = scalar_select %p441, %s440, 15
      %s443 = smul.addr %s442, 8
      %s444 = scalar_lea.vmem %s12, %s443
      %s445 = smul.u32 16, %s29
      %p446 = scmp.lt.s32.totalorder %s30, 2
      %s447 = scalar_select %p446, %s30, 2
      %p448 = scmp.lt.s32.totalorder %s445, 15
      %s449 = scalar_select %p448, %s445, 15
      %s450 = smul.addr %s447, 16
      %s451 = sadd.s32 %s449, %s450
      %s452 = smul.addr %s451, 4
      %s453 = scalar_lea.vmem %s0, %s452
      %s454 = smul.u32 16, %s29
      %s455 = smul.u32 16, %s29
      %p456 = scmp.lt.s32.totalorder %s455, 15
      %s457 = scalar_select %p456, %s455, 15
      %s458 = smul.addr %s457, 8
      %s459 = scalar_lea.vmem %s2, %s458
      %s460 = smul.u32 16, %s29
      %s461 = smul.u32 16, %s29
      %p462 = scmp.lt.s32.totalorder %s461, 15
      %s463 = scalar_select %p462, %s461, 15
      %s464 = smul.addr %s463, 8
      %s465 = scalar_lea.vmem %s12, %s464
      %s466 = smul.u32 16, %s29
      %p468 = scmp.eq.s32.totalorder %s30, 0
      // Predicated region
      $region69: #{tpu_custom_call.1} parent=67 // pred_check
        %p469 = pneg %p468
      $region70: #{tpu_custom_call.1} parent=67 // pred_check_branch
        %471 = sbr.rel (%p469) target = $region72
      $region71: #{tpu_custom_call.1} parent=67 // pred_region
        %v472 = vld [vmem:[%s459] sm:$0xff]
        %v473 = vld [vmem:[%s459 + $0x8] sm:$0xff]
        %v474 = vld [vmem:[%s459 + $0x10] sm:$0xff]
        %v475 = vld [vmem:[%s459 + $0x18] sm:$0xff]
        %v476 = vld [vmem:[%s459 + $0x20] sm:$0xff]
        %v477 = vld [vmem:[%s459 + $0x28] sm:$0xff]
        %v478 = vld [vmem:[%s459 + $0x30] sm:$0xff]
        %v479 = vld [vmem:[%s459 + $0x38] sm:$0xff]
        %v480 = vld [vmem:[%s459 + $0x40] sm:$0xff]
        %v481 = vld [vmem:[%s459 + $0x48] sm:$0xff]
        %v482 = vld [vmem:[%s459 + $0x50] sm:$0xff]
        %v483 = vld [vmem:[%s459 + $0x58] sm:$0xff]
        %v484 = vld [vmem:[%s459 + $0x60] sm:$0xff]
        %v485 = vld [vmem:[%s459 + $0x68] sm:$0xff]
        %v486 = vld [vmem:[%s459 + $0x70] sm:$0xff]
        %v487 = vld [vmem:[%s459 + $0x78] sm:$0xff]
        %v488 = vld [vmem:[%s3] sm:$0xff]
        %v489 = vld [vmem:[%s3 + $0x8] sm:$0xff]
        %v490 = vld [vmem:[%s4] sm:$0x1]
        %v492 = vlaneseq
        %v493 = vshrl.u32 %v492, 7
        %v494 = vsub.s32 0, %v493
        %v495 = vrot.slane %v490, %v494
        %vm497 = vcmask 130048
        %v499 = vsel %vm497, %v472, 0
        %v502 = vsel %vm497, %v473, 0
        %v505 = vsel %vm497, %v474, 0
        %v508 = vsel %vm497, %v475, 0
        %v511 = vsel %vm497, %v476, 0
        %v514 = vsel %vm497, %v477, 0
        %v517 = vsel %vm497, %v478, 0
        %v520 = vsel %vm497, %v479, 0
        %v523 = vsel %vm497, %v480, 0
        %v526 = vsel %vm497, %v481, 0
        %v529 = vsel %vm497, %v482, 0
        %v532 = vsel %vm497, %v483, 0
        %v535 = vsel %vm497, %v484, 0
        %v538 = vsel %vm497, %v485, 0
        %v541 = vsel %vm497, %v486, 0
        %v544 = vsel %vm497, %v487, 0
        %546 = vmatprep.subr.mxu0 0.0
        %547 = vmatpush1.msra.mxu0 %v488
        %548 = vmatprep.subr.mxu0 0.0
        %549 = vmatpush1.msra.mxu0 %v489
        %550 = vmatprep.subr.mxu0 0.0
        %551 = vmatpush1.msra.mxu0 0.0
        %552 = vmatprep.subr.mxu0 0.0
        %553 = vmatpush1.msra.mxu0 0.0
        %554 = vmatprep.subr.mxu0 0.0
        %555 = vmatpush1.msra.mxu0 0.0
        %556 = vmatprep.subr.mxu0 0.0
        %557 = vmatpush1.msra.mxu0 0.0
        %558 = vmatprep.subr.mxu0 0.0
        %559 = vmatpush1.msra.mxu0 0.0
        %560 = vmatprep.subr.mxu0 0.0
        %561 = vmatpush1.msra.mxu0 0.0
        %562 = vmatprep.subr.mxu0 0.0
        %563 = vmatpush1.msra.mxu0 0.0
        %564 = vmatprep.subr.mxu0 0.0
        %565 = vmatpush1.msra.mxu0 0.0
        %566 = vmatprep.subr.mxu0 0.0
        %567 = vmatpush1.msra.mxu0 0.0
        %568 = vmatprep.subr.mxu0 0.0
        %569 = vmatpush1.msra.mxu0 0.0
        %570 = vmatprep.subr.mxu0 0.0
        %571 = vmatpush1.msra.mxu0 0.0
        %572 = vmatprep.subr.mxu0 0.0
        %573 = vmatpush1.msra.mxu0 0.0
        %574 = vmatprep.subr.mxu0 0.0
        %575 = vmatpush1.msra.mxu0 0.0
        %576 = vmatprep.subr.mxu0 0.0
        %577 = vmatpush1.msra.mxu0 0.0
        %578 = vmatprep.subr.mxu0 0.0
        %579 = vmatpush1.msra.mxu0 0.0
        %580 = vmatprep.subr.mxu0 0.0
        %581 = vmatpush1.msra.mxu0 0.0
        %582 = vmatprep.subr.mxu0 0.0
        %583 = vmatpush1.msra.mxu0 0.0
        %584 = vmatprep.subr.mxu0 0.0
        %585 = vmatpush1.msra.mxu0 0.0
        %586 = vmatprep.subr.mxu0 0.0
        %587 = vmatpush1.msra.mxu0 0.0
        %588 = vmatprep.subr.mxu0 0.0
        %589 = vmatpush1.msra.mxu0 0.0
        %590 = vmatprep.subr.mxu0 0.0
        %591 = vmatpush1.msra.mxu0 0.0
        %592 = vmatprep.subr.mxu0 0.0
        %593 = vmatpush1.msra.mxu0 0.0
        %594 = vmatprep.subr.mxu0 0.0
        %595 = vmatpush1.msra.mxu0 0.0
        %596 = vmatprep.subr.mxu0 0.0
        %597 = vmatpush1.msra.mxu0 0.0
        %598 = vmatprep.subr.mxu0 0.0
        %599 = vmatpush1.msra.mxu0 0.0
        %600 = vmatprep.subr.mxu0 0.0
        %601 = vmatpush1.msra.mxu0 0.0
        %602 = vmatprep.subr.mxu0 0.0
        %603 = vmatpush1.msra.mxu0 0.0
        %604 = vmatprep.subr.mxu0 0.0
        %605 = vmatpush1.msra.mxu0 0.0
        %606 = vmatprep.subr.mxu0 0.0
        %607 = vmatpush1.msra.mxu0 0.0
        %608 = vmatprep.subr.mxu0 0.0
        %609 = vmatpush1.msra.mxu0 0.0
        %610 = vmatprep.mubr.f32.mxu0 0.0
        %611 = vmatmul.mubr.f32.gmra.mrb[0].mxu0 %v499
        %v612 = vpop.f32.mrb[0].mxu0
        %v613 = vadd.f32 %v495, %v612
        %v614 = vpop.f32.mrb[0].mxu0
        %615 = vmatprep.mubr.f32.mxu0 0.0
        %616 = vmatmul.mubr.f32.gmra.mrb[0].mxu0 %v502
        %v617 = vpop.f32.mrb[0].mxu0
        %v618 = vadd.f32 %v495, %v617
        %v619 = vpop.f32.mrb[0].mxu0
        %620 = vmatprep.mubr.f32.mxu0 0.0
        %621 = vmatmul.mubr.f32.gmra.mrb[0].mxu0 %v505
        %v622 = vpop.f32.mrb[0].mxu0
        %v623 = vadd.f32 %v495, %v622
        %v624 = vpop.f32.mrb[0].mxu0
        %625 = vmatprep.mubr.f32.mxu0 0.0
        %626 = vmatmul.mubr.f32.gmra.mrb[0].mxu0 %v508
        %v627 = vpop.f32.mrb[0].mxu0
        %v628 = vadd.f32 %v495, %v627
        %v629 = vpop.f32.mrb[0].mxu0
        %630 = vmatprep.mubr.f32.mxu0 0.0
        %631 = vmatmul.mubr.f32.gmra.mrb[0].mxu0 %v511
        %v632 = vpop.f32.mrb[0].mxu0
        %v633 = vadd.f32 %v495, %v632
        %v634 = vpop.f32.mrb[0].mxu0
        %635 = vmatprep.mubr.f32.mxu0 0.0
        %636 = vmatmul.mubr.f32.gmra.mrb[0].mxu0 %v514
        %v637 = vpop.f32.mrb[0].mxu0
        %v638 = vadd.f32 %v495, %v637
        %v639 = vpop.f32.mrb[0].mxu0
        %640 = vmatprep.mubr.f32.mxu0 0.0
        %641 = vmatmul.mubr.f32.gmra.mrb[0].mxu0 %v517
        %v642 = vpop.f32.mrb[0].mxu0
        %v643 = vadd.f32 %v495, %v642
        %v644 = vpop.f32.mrb[0].mxu0
        %645 = vmatprep.mubr.f32.mxu0 0.0
        %646 = vmatmul.mubr.f32.gmra.mrb[0].mxu0 %v520
        %v647 = vpop.f32.mrb[0].mxu0
        %v648 = vadd.f32 %v495, %v647
        %v649 = vpop.f32.mrb[0].mxu0
        %650 = vmatprep.mubr.f32.mxu0 0.0
        %651 = vmatmul.mubr.f32.gmra.mrb[0].mxu0 %v523
        %v652 = vpop.f32.mrb[0].mxu0
        %v653 = vadd.f32 %v495, %v652
        %v654 = vpop.f32.mrb[0].mxu0
        %655 = vmatprep.mubr.f32.mxu0 0.0
        %656 = vmatmul.mubr.f32.gmra.mrb[0].mxu0 %v526
        %v657 = vpop.f32.mrb[0].mxu0
        %v658 = vadd.f32 %v495, %v657
        %v659 = vpop.f32.mrb[0].mxu0
        %660 = vmatprep.mubr.f32.mxu0 0.0
        %661 = vmatmul.mubr.f32.gmra.mrb[0].mxu0 %v529
        %v662 = vpop.f32.mrb[0].mxu0
        %v663 = vadd.f32 %v495, %v662
        %v664 = vpop.f32.mrb[0].mxu0
        %665 = vmatprep.mubr.f32.mxu0 0.0
        %666 = vmatmul.mubr.f32.gmra.mrb[0].mxu0 %v532
        %v667 = vpop.f32.mrb[0].mxu0
        %v668 = vadd.f32 %v495, %v667
        %v669 = vpop.f32.mrb[0].mxu0
        %670 = vmatprep.mubr.f32.mxu0 0.0
        %671 = vmatmul.mubr.f32.gmra.mrb[0].mxu0 %v535
        %v672 = vpop.f32.mrb[0].mxu0
        %v673 = vadd.f32 %v495, %v672
        %v674 = vpop.f32.mrb[0].mxu0
        %675 = vmatprep.mubr.f32.mxu0 0.0
        %676 = vmatmul.mubr.f32.gmra.mrb[0].mxu0 %v538
        %v677 = vpop.f32.mrb[0].mxu0
        %v678 = vadd.f32 %v495, %v677
        %v679 = vpop.f32.mrb[0].mxu0
        %680 = vmatprep.mubr.f32.mxu0 0.0
        %681 = vmatmul.mubr.f32.gmra.mrb[0].mxu0 %v541
        %v682 = vpop.f32.mrb[0].mxu0
        %v683 = vadd.f32 %v495, %v682
        %v684 = vpop.f32.mrb[0].mxu0
        %685 = vmatprep.mubr.f32.mxu0 0.0
        %686 = vmatmul.mubr.f32.gmra.mrb[0].mxu0 %v544
        %v687 = vpop.f32.mrb[0].mxu0
        %v688 = vadd.f32 %v495, %v687
        %v689 = vpop.f32.mrb[0].mxu0
        %690 = vdwg.mxu0
        %691 = vst.msk [vmem:[#allocation2] sm:$0xff] %vm497, %v613
        %692 = vst.msk [vmem:[#allocation2 + $0x8] sm:$0xff] %vm497, %v618
        %693 = vst.msk [vmem:[#allocation2 + $0x10] sm:$0xff] %vm497, %v623
        %694 = vst.msk [vmem:[#allocation2 + $0x18] sm:$0xff] %vm497, %v628
        %695 = vst.msk [vmem:[#allocation2 + $0x20] sm:$0xff] %vm497, %v633
        %696 = vst.msk [vmem:[#allocation2 + $0x28] sm:$0xff] %vm497, %v638
        %697 = vst.msk [vmem:[#allocation2 + $0x30] sm:$0xff] %vm497, %v643
        %698 = vst.msk [vmem:[#allocation2 + $0x38] sm:$0xff] %vm497, %v648
        %699 = vst.msk [vmem:[#allocation2 + $0x40] sm:$0xff] %vm497, %v653
        %700 = vst.msk [vmem:[#allocation2 + $0x48] sm:$0xff] %vm497, %v658
        %701 = vst.msk [vmem:[#allocation2 + $0x50] sm:$0xff] %vm497, %v663
        %702 = vst.msk [vmem:[#allocation2 + $0x58] sm:$0xff] %vm497, %v668
        %703 = vst.msk [vmem:[#allocation2 + $0x60] sm:$0xff] %vm497, %v673
        %704 = vst.msk [vmem:[#allocation2 + $0x68] sm:$0xff] %vm497, %v678
        %705 = vst.msk [vmem:[#allocation2 + $0x70] sm:$0xff] %vm497, %v683
        %706 = vst.msk [vmem:[#allocation2 + $0x78] sm:$0xff] %vm497, %v688
        %723 = vrot.lane.b32.xlu0 %v613, 112
        %v724 = vpop.permute.xlu0 %723
        %725 = vrot.lane.b32.xlu0 %v618, 112
        %v726 = vpop.permute.xlu0 %725
        %727 = vrot.lane.b32.xlu0 %v623, 112
        %v728 = vpop.permute.xlu0 %727
        %729 = vrot.lane.b32.xlu0 %v628, 112
        %v730 = vpop.permute.xlu0 %729
        %731 = vrot.lane.b32.xlu0 %v633, 112
        %v732 = vpop.permute.xlu0 %731
        %733 = vrot.lane.b32.xlu0 %v638, 112
        %v734 = vpop.permute.xlu0 %733
        %735 = vrot.lane.b32.xlu0 %v643, 112
        %v736 = vpop.permute.xlu0 %735
        %737 = vrot.lane.b32.xlu0 %v648, 112
        %v738 = vpop.permute.xlu0 %737
        %739 = vrot.lane.b32.xlu0 %v653, 112
        %v740 = vpop.permute.xlu0 %739
        %741 = vrot.lane.b32.xlu0 %v658, 112
        %v742 = vpop.permute.xlu0 %741
        %743 = vrot.lane.b32.xlu0 %v663, 112
        %v744 = vpop.permute.xlu0 %743
        %745 = vrot.lane.b32.xlu0 %v668, 112
        %v746 = vpop.permute.xlu0 %745
        %747 = vrot.lane.b32.xlu0 %v673, 112
        %v748 = vpop.permute.xlu0 %747
        %749 = vrot.lane.b32.xlu0 %v678, 112
        %v750 = vpop.permute.xlu0 %749
        %751 = vrot.lane.b32.xlu0 %v683, 112
        %v752 = vpop.permute.xlu0 %751
        %753 = vrot.lane.b32.xlu0 %v688, 112
        %v754 = vpop.permute.xlu0 %753
        %771 = vst.msk [vmem:[#allocation3] sm:$0xff] %vm497, %v724
        %772 = vst.msk [vmem:[#allocation3 + $0x8] sm:$0xff] %vm497, %v726
        %773 = vst.msk [vmem:[#allocation3 + $0x10] sm:$0xff] %vm497, %v728
        %774 = vst.msk [vmem:[#allocation3 + $0x18] sm:$0xff] %vm497, %v730
        %775 = vst.msk [vmem:[#allocation3 + $0x20] sm:$0xff] %vm497, %v732
        %776 = vst.msk [vmem:[#allocation3 + $0x28] sm:$0xff] %vm497, %v734
        %777 = vst.msk [vmem:[#allocation3 + $0x30] sm:$0xff] %vm497, %v736
        %778 = vst.msk [vmem:[#allocation3 + $0x38] sm:$0xff] %vm497, %v738
        %779 = vst.msk [vmem:[#allocation3 + $0x40] sm:$0xff] %vm497, %v740
        %780 = vst.msk [vmem:[#allocation3 + $0x48] sm:$0xff] %vm497, %v742
        %781 = vst.msk [vmem:[#allocation3 + $0x50] sm:$0xff] %vm497, %v744
        %782 = vst.msk [vmem:[#allocation3 + $0x58] sm:$0xff] %vm497, %v746
        %783 = vst.msk [vmem:[#allocation3 + $0x60] sm:$0xff] %vm497, %v748
        %784 = vst.msk [vmem:[#allocation3 + $0x68] sm:$0xff] %vm497, %v750
        %785 = vst.msk [vmem:[#allocation3 + $0x70] sm:$0xff] %vm497, %v752
        %786 = vst.msk [vmem:[#allocation3 + $0x78] sm:$0xff] %vm497, %v754
        %v787 = vmax.f32 %v613, 0.0
        %v788 = vmax.f32 %v618, 0.0
        %v789 = vmax.f32 %v623, 0.0
        %v790 = vmax.f32 %v628, 0.0
        %v791 = vmax.f32 %v633, 0.0
        %v792 = vmax.f32 %v638, 0.0
        %v793 = vmax.f32 %v643, 0.0
        %v794 = vmax.f32 %v648, 0.0
        %v795 = vmax.f32 %v653, 0.0
        %v796 = vmax.f32 %v658, 0.0
        %v797 = vmax.f32 %v663, 0.0
        %v798 = vmax.f32 %v668, 0.0
        %v799 = vmax.f32 %v673, 0.0
        %v800 = vmax.f32 %v678, 0.0
        %v801 = vmax.f32 %v683, 0.0
        %v802 = vmax.f32 %v688, 0.0
        %v803 = vld [vmem:[%s5] sm:$0xff]
        %v804 = vld [vmem:[%s5 + $0x8] sm:$0xff]
        %v805 = vld [vmem:[%s5 + $0x10] sm:$0xff]
        %v806 = vld [vmem:[%s5 + $0x18] sm:$0xff]
        %v807 = vld [vmem:[#allocation7] sm:$0x1]
        %v809 = vlaneseq
        %v810 = vshrl.u32 %v809, 7
        %v811 = vsub.s32 0, %v810
        %v812 = vrot.slane %v807, %v811
        %830 = vrot.lane.b32.xlu0 %v787, 96
        %v831 = vpop.permute.xlu0 %830
        %832 = vrot.lane.b32.xlu0 %v788, 96
        %v833 = vpop.permute.xlu0 %832
        %834 = vrot.lane.b32.xlu0 %v789, 96
        %v835 = vpop.permute.xlu0 %834
        %836 = vrot.lane.b32.xlu0 %v790, 96
        %v837 = vpop.permute.xlu0 %836
        %838 = vrot.lane.b32.xlu0 %v791, 96
        %v839 = vpop.permute.xlu0 %838
        %840 = vrot.lane.b32.xlu0 %v792, 96
        %v841 = vpop.permute.xlu0 %840
        %842 = vrot.lane.b32.xlu0 %v793, 96
        %v843 = vpop.permute.xlu0 %842
        %844 = vrot.lane.b32.xlu0 %v794, 96
        %v845 = vpop.permute.xlu0 %844
        %846 = vrot.lane.b32.xlu0 %v795, 96
        %v847 = vpop.permute.xlu0 %846
        %848 = vrot.lane.b32.xlu0 %v796, 96
        %v849 = vpop.permute.xlu0 %848
        %850 = vrot.lane.b32.xlu0 %v797, 96
        %v851 = vpop.permute.xlu0 %850
        %852 = vrot.lane.b32.xlu0 %v798, 96
        %v853 = vpop.permute.xlu0 %852
        %854 = vrot.lane.b32.xlu0 %v799, 96
        %v855 = vpop.permute.xlu0 %854
        %856 = vrot.lane.b32.xlu0 %v800, 96
        %v857 = vpop.permute.xlu0 %856
        %858 = vrot.lane.b32.xlu0 %v801, 96
        %v859 = vpop.permute.xlu0 %858
        %860 = vrot.lane.b32.xlu0 %v802, 96
        %v861 = vpop.permute.xlu0 %860
        %vm862 = vcmask 261120
        %v863 = vsel %vm862, %v831, 0
        %v865 = vsel %vm862, %v833, 0
        %v867 = vsel %vm862, %v835, 0
        %v869 = vsel %vm862, %v837, 0
        %v871 = vsel %vm862, %v839, 0
        %v873 = vsel %vm862, %v841, 0
        %v875 = vsel %vm862, %v843, 0
        %v877 = vsel %vm862, %v845, 0
        %v879 = vsel %vm862, %v847, 0
        %v881 = vsel %vm862, %v849, 0
        %v883 = vsel %vm862, %v851, 0
        %v885 = vsel %vm862, %v853, 0
        %v887 = vsel %vm862, %v855, 0
        %v889 = vsel %vm862, %v857, 0
        %v891 = vsel %vm862, %v859, 0
        %v893 = vsel %vm862, %v861, 0
        %895 = vmatprep.subr.mxu0 0.0
        %896 = vmatpush1.msra.mxu0 %v803
        %897 = vmatprep.subr.mxu0 0.0
        %898 = vmatpush1.msra.mxu0 %v804
        %899 = vmatprep.subr.mxu0 0.0
        %900 = vmatpush1.msra.mxu0 %v805
        %901 = vmatprep.subr.mxu0 0.0
        %902 = vmatpush1.msra.mxu0 %v806
        %903 = vmatprep.subr.mxu0 0.0
        %904 = vmatpush1.msra.mxu0 0.0
        %905 = vmatprep.subr.mxu0 0.0
        %906 = vmatpush1.msra.mxu0 0.0
        %907 = vmatprep.subr.mxu0 0.0
        %908 = vmatpush1.msra.mxu0 0.0
        %909 = vmatprep.subr.mxu0 0.0
        %910 = vmatpush1.msra.mxu0 0.0
        %911 = vmatprep.subr.mxu0 0.0
        %912 = vmatpush1.msra.mxu0 0.0
        %913 = vmatprep.subr.mxu0 0.0
        %914 = vmatpush1.msra.mxu0 0.0
        %915 = vmatprep.subr.mxu0 0.0
        %916 = vmatpush1.msra.mxu0 0.0
        %917 = vmatprep.subr.mxu0 0.0
        %918 = vmatpush1.msra.mxu0 0.0
        %919 = vmatprep.subr.mxu0 0.0
        %920 = vmatpush1.msra.mxu0 0.0
        %921 = vmatprep.subr.mxu0 0.0
        %922 = vmatpush1.msra.mxu0 0.0
        %923 = vmatprep.subr.mxu0 0.0
        %924 = vmatpush1.msra.mxu0 0.0
        %925 = vmatprep.subr.mxu0 0.0
        %926 = vmatpush1.msra.mxu0 0.0
        %927 = vmatprep.subr.mxu0 0.0
        %928 = vmatpush1.msra.mxu0 0.0
        %929 = vmatprep.subr.mxu0 0.0
        %930 = vmatpush1.msra.mxu0 0.0
        %931 = vmatprep.subr.mxu0 0.0
        %932 = vmatpush1.msra.mxu0 0.0
        %933 = vmatprep.subr.mxu0 0.0
        %934 = vmatpush1.msra.mxu0 0.0
        %935 = vmatprep.subr.mxu0 0.0
        %936 = vmatpush1.msra.mxu0 0.0
        %937 = vmatprep.subr.mxu0 0.0
        %938 = vmatpush1.msra.mxu0 0.0
        %939 = vmatprep.subr.mxu0 0.0
        %940 = vmatpush1.msra.mxu0 0.0
        %941 = vmatprep.subr.mxu0 0.0
        %942 = vmatpush1.msra.mxu0 0.0
        %943 = vmatprep.subr.mxu0 0.0
        %944 = vmatpush1.msra.mxu0 0.0
        %945 = vmatprep.subr.mxu0 0.0
        %946 = vmatpush1.msra.mxu0 0.0
        %947 = vmatprep.subr.mxu0 0.0
        %948 = vmatpush1.msra.mxu0 0.0
        %949 = vmatprep.subr.mxu0 0.0
        %950 = vmatpush1.msra.mxu0 0.0
        %951 = vmatprep.subr.mxu0 0.0
        %952 = vmatpush1.msra.mxu0 0.0
        %953 = vmatprep.subr.mxu0 0.0
        %954 = vmatpush1.msra.mxu0 0.0
        %955 = vmatprep.subr.mxu0 0.0
        %956 = vmatpush1.msra.mxu0 0.0
        %957 = vmatprep.subr.mxu0 0.0
        %958 = vmatpush1.msra.mxu0 0.0
        %959 = vmatprep.mubr.f32.mxu0 0.0
        %960 = vmatmul.mubr.f32.gmra.mrb[0].mxu0 %v863
        %v961 = vpop.f32.mrb[0].mxu0
        %v962 = vadd.f32 %v812, %v961
        %v963 = vpop.f32.mrb[0].mxu0
        %964 = vmatprep.mubr.f32.mxu0 0.0
        %965 = vmatmul.mubr.f32.gmra.mrb[0].mxu0 %v865
        %v966 = vpop.f32.mrb[0].mxu0
        %v967 = vadd.f32 %v812, %v966
        %v968 = vpop.f32.mrb[0].mxu0
        %969 = vmatprep.mubr.f32.mxu0 0.0
        %970 = vmatmul.mubr.f32.gmra.mrb[0].mxu0 %v867
        %v971 = vpop.f32.mrb[0].mxu0
        %v972 = vadd.f32 %v812, %v971
        %v973 = vpop.f32.mrb[0].mxu0
        %974 = vmatprep.mubr.f32.mxu0 0.0
        %975 = vmatmul.mubr.f32.gmra.mrb[0].mxu0 %v869
        %v976 = vpop.f32.mrb[0].mxu0
        %v977 = vadd.f32 %v812, %v976
        %v978 = vpop.f32.mrb[0].mxu0
        %979 = vmatprep.mubr.f32.mxu0 0.0
        %980 = vmatmul.mubr.f32.gmra.mrb[0].mxu0 %v871
        %v981 = vpop.f32.mrb[0].mxu0
        %v982 = vadd.f32 %v812, %v981
        %v983 = vpop.f32.mrb[0].mxu0
        %984 = vmatprep.mubr.f32.mxu0 0.0
        %985 = vmatmul.mubr.f32.gmra.mrb[0].mxu0 %v873
        %v986 = vpop.f32.mrb[0].mxu0
        %v987 = vadd.f32 %v812, %v986
        %v988 = vpop.f32.mrb[0].mxu0
        %989 = vmatprep.mubr.f32.mxu0 0.0
        %990 = vmatmul.mubr.f32.gmra.mrb[0].mxu0 %v875
        %v991 = vpop.f32.mrb[0].mxu0
        %v992 = vadd.f32 %v812, %v991
        %v993 = vpop.f32.mrb[0].mxu0
        %994 = vmatprep.mubr.f32.mxu0 0.0
        %995 = vmatmul.mubr.f32.gmra.mrb[0].mxu0 %v877
        %v996 = vpop.f32.mrb[0].mxu0
        %v997 = vadd.f32 %v812, %v996
        %v998 = vpop.f32.mrb[0].mxu0
        %999 = vmatprep.mubr.f32.mxu0 0.0
        %1000 = vmatmul.mubr.f32.gmra.mrb[0].mxu0 %v879
        %v1001 = vpop.f32.mrb[0].mxu0
        %v1002 = vadd.f32 %v812, %v1001
        %v1003 = vpop.f32.mrb[0].mxu0
        %1004 = vmatprep.mubr.f32.mxu0 0.0
        %1005 = vmatmul.mubr.f32.gmra.mrb[0].mxu0 %v881
        %v1006 = vpop.f32.mrb[0].mxu0
        %v1007 = vadd.f32 %v812, %v1006
        %v1008 = vpop.f32.mrb[0].mxu0
        %1009 = vmatprep.mubr.f32.mxu0 0.0
        %1010 = vmatmul.mubr.f32.gmra.mrb[0].mxu0 %v883
        %v1011 = vpop.f32.mrb[0].mxu0
        %v1012 = vadd.f32 %v812, %v1011
        %v1013 = vpop.f32.mrb[0].mxu0
        %1014 = vmatprep.mubr.f32.mxu0 0.0
        %1015 = vmatmul.mubr.f32.gmra.mrb[0].mxu0 %v885
        %v1016 = vpop.f32.mrb[0].mxu0
        %v1017 = vadd.f32 %v812, %v1016
        %v1018 = vpop.f32.mrb[0].mxu0
        %1019 = vmatprep.mubr.f32.mxu0 0.0
        %1020 = vmatmul.mubr.f32.gmra.mrb[0].mxu0 %v887
        %v1021 = vpop.f32.mrb[0].mxu0
        %v1022 = vadd.f32 %v812, %v1021
        %v1023 = vpop.f32.mrb[0].mxu0
        %1024 = vmatprep.mubr.f32.mxu0 0.0
        %1025 = vmatmul.mubr.f32.gmra.mrb[0].mxu0 %v889
        %v1026 = vpop.f32.mrb[0].mxu0
        %v1027 = vadd.f32 %v812, %v1026
        %v1028 = vpop.f32.mrb[0].mxu0
        %1029 = vmatprep.mubr.f32.mxu0 0.0
        %1030 = vmatmul.mubr.f32.gmra.mrb[0].mxu0 %v891
        %v1031 = vpop.f32.mrb[0].mxu0
        %v1032 = vadd.f32 %v812, %v1031
        %v1033 = vpop.f32.mrb[0].mxu0
        %1034 = vmatprep.mubr.f32.mxu0 0.0
        %1035 = vmatmul.mubr.f32.gmra.mrb[0].mxu0 %v893
        %v1036 = vpop.f32.mrb[0].mxu0
        %v1037 = vadd.f32 %v812, %v1036
        %v1038 = vpop.f32.mrb[0].mxu0
        %1039 = vdwg.mxu0
        %v1040 = vxor.u32 %v962, 2147483648
        %v1041 = vxor.u32 %v967, 2147483648
        %v1042 = vxor.u32 %v972, 2147483648
        %v1043 = vxor.u32 %v977, 2147483648
        %v1044 = vxor.u32 %v982, 2147483648
        %v1045 = vxor.u32 %v987, 2147483648
        %v1046 = vxor.u32 %v992, 2147483648
        %v1047 = vxor.u32 %v997, 2147483648
        %v1048 = vxor.u32 %v1002, 2147483648
        %v1049 = vxor.u32 %v1007, 2147483648
        %v1050 = vxor.u32 %v1012, 2147483648
        %v1051 = vxor.u32 %v1017, 2147483648
        %v1052 = vxor.u32 %v1022, 2147483648
        %v1053 = vxor.u32 %v1027, 2147483648
        %v1054 = vxor.u32 %v1032, 2147483648
        %v1055 = vxor.u32 %v1037, 2147483648
        %v1056 = vmul.f32 %v1040, 1.442695
        %v1057 = vpow.pop %v1056
        %v1058 = vmul.f32 %v1041, 1.442695
        %v1059 = vpow.pop %v1058
        %v1060 = vmul.f32 %v1042, 1.442695
        %v1061 = vpow.pop %v1060
        %v1062 = vmul.f32 %v1043, 1.442695
        %v1063 = vpow.pop %v1062
        %v1064 = vmul.f32 %v1044, 1.442695
        %v1065 = vpow.pop %v1064
        %v1066 = vmul.f32 %v1045, 1.442695
        %v1067 = vpow.pop %v1066
        %v1068 = vmul.f32 %v1046, 1.442695
        %v1069 = vpow.pop %v1068
        %v1070 = vmul.f32 %v1047, 1.442695
        %v1071 = vpow.pop %v1070
        %v1072 = vmul.f32 %v1048, 1.442695
        %v1073 = vpow.pop %v1072
        %v1074 = vmul.f32 %v1049, 1.442695
        %v1075 = vpow.pop %v1074
        %v1076 = vmul.f32 %v1050, 1.442695
        %v1077 = vpow.pop %v1076
        %v1078 = vmul.f32 %v1051, 1.442695
        %v1079 = vpow.pop %v1078
        %v1080 = vmul.f32 %v1052, 1.442695
        %v1081 = vpow.pop %v1080
        %v1082 = vmul.f32 %v1053, 1.442695
        %v1083 = vpow.pop %v1082
        %v1084 = vmul.f32 %v1054, 1.442695
        %v1085 = vpow.pop %v1084
        %v1086 = vmul.f32 %v1055, 1.442695
        %v1087 = vpow.pop %v1086
        %v1088 = vadd.f32 %v1057, 1.0
        %v1089 = vadd.f32 %v1059, 1.0
        %v1090 = vadd.f32 %v1061, 1.0
        %v1091 = vadd.f32 %v1063, 1.0
        %v1092 = vadd.f32 %v1065, 1.0
        %v1093 = vadd.f32 %v1067, 1.0
        %v1094 = vadd.f32 %v1069, 1.0
        %v1095 = vadd.f32 %v1071, 1.0
        %v1096 = vadd.f32 %v1073, 1.0
        %v1097 = vadd.f32 %v1075, 1.0
        %v1098 = vadd.f32 %v1077, 1.0
        %v1099 = vadd.f32 %v1079, 1.0
        %v1100 = vadd.f32 %v1081, 1.0
        %v1101 = vadd.f32 %v1083, 1.0
        %v1102 = vadd.f32 %v1085, 1.0
        %v1103 = vadd.f32 %v1087, 1.0
        %v1104 = vrcp.pop %v1088
        %v1105 = vmul.f32 1.0, %v1104
        %v1106 = vrcp.pop %v1089
        %v1107 = vmul.f32 1.0, %v1106
        %v1108 = vrcp.pop %v1090
        %v1109 = vmul.f32 1.0, %v1108
        %v1110 = vrcp.pop %v1091
        %v1111 = vmul.f32 1.0, %v1110
        %v1112 = vrcp.pop %v1092
        %v1113 = vmul.f32 1.0, %v1112
        %v1114 = vrcp.pop %v1093
        %v1115 = vmul.f32 1.0, %v1114
        %v1116 = vrcp.pop %v1094
        %v1117 = vmul.f32 1.0, %v1116
        %v1118 = vrcp.pop %v1095
        %v1119 = vmul.f32 1.0, %v1118
        %v1120 = vrcp.pop %v1096
        %v1121 = vmul.f32 1.0, %v1120
        %v1122 = vrcp.pop %v1097
        %v1123 = vmul.f32 1.0, %v1122
        %v1124 = vrcp.pop %v1098
        %v1125 = vmul.f32 1.0, %v1124
        %v1126 = vrcp.pop %v1099
        %v1127 = vmul.f32 1.0, %v1126
        %v1128 = vrcp.pop %v1100
        %v1129 = vmul.f32 1.0, %v1128
        %v1130 = vrcp.pop %v1101
        %v1131 = vmul.f32 1.0, %v1130
        %v1132 = vrcp.pop %v1102
        %v1133 = vmul.f32 1.0, %v1132
        %v1134 = vrcp.pop %v1103
        %v1135 = vmul.f32 1.0, %v1134
        %vm1136 = vcmask 7168
        %1137 = vst.msk [vmem:[#allocation4] sm:$0xff] %vm1136, %v1105
        %1138 = vst.msk [vmem:[#allocation4 + $0x8] sm:$0xff] %vm1136, %v1107
        %1139 = vst.msk [vmem:[#allocation4 + $0x10] sm:$0xff] %vm1136, %v1109
        %1140 = vst.msk [vmem:[#allocation4 + $0x18] sm:$0xff] %vm1136, %v1111
        %1141 = vst.msk [vmem:[#allocation4 + $0x20] sm:$0xff] %vm1136, %v1113
        %1142 = vst.msk [vmem:[#allocation4 + $0x28] sm:$0xff] %vm1136, %v1115
        %1143 = vst.msk [vmem:[#allocation4 + $0x30] sm:$0xff] %vm1136, %v1117
        %1144 = vst.msk [vmem:[#allocation4 + $0x38] sm:$0xff] %vm1136, %v1119
        %1145 = vst.msk [vmem:[#allocation4 + $0x40] sm:$0xff] %vm1136, %v1121
        %1146 = vst.msk [vmem:[#allocation4 + $0x48] sm:$0xff] %vm1136, %v1123
        %1147 = vst.msk [vmem:[#allocation4 + $0x50] sm:$0xff] %vm1136, %v1125
        %1148 = vst.msk [vmem:[#allocation4 + $0x58] sm:$0xff] %vm1136, %v1127
        %1149 = vst.msk [vmem:[#allocation4 + $0x60] sm:$0xff] %vm1136, %v1129
        %1150 = vst.msk [vmem:[#allocation4 + $0x68] sm:$0xff] %vm1136, %v1131
        %1151 = vst.msk [vmem:[#allocation4 + $0x70] sm:$0xff] %vm1136, %v1133
        %1152 = vst.msk [vmem:[#allocation4 + $0x78] sm:$0xff] %vm1136, %v1135
        %1153 = vrot.lane.b32.xlu0 %v613, 64
        %v1154 = vpop.permute.xlu0 %1153
        %1155 = vrot.lane.b32.xlu0 %v618, 64
        %v1156 = vpop.permute.xlu0 %1155
        %1157 = vrot.lane.b32.xlu0 %v623, 64
        %v1158 = vpop.permute.xlu0 %1157
        %1159 = vrot.lane.b32.xlu0 %v628, 64
        %v1160 = vpop.permute.xlu0 %1159
        %1161 = vrot.lane.b32.xlu0 %v633, 64
        %v1162 = vpop.permute.xlu0 %1161
        %1163 = vrot.lane.b32.xlu0 %v638, 64
        %v1164 = vpop.permute.xlu0 %1163
        %1165 = vrot.lane.b32.xlu0 %v643, 64
        %v1166 = vpop.permute.xlu0 %1165
        %1167 = vrot.lane.b32.xlu0 %v648, 64
        %v1168 = vpop.permute.xlu0 %1167
        %1169 = vrot.lane.b32.xlu0 %v653, 64
        %v1170 = vpop.permute.xlu0 %1169
        %1171 = vrot.lane.b32.xlu0 %v658, 64
        %v1172 = vpop.permute.xlu0 %1171
        %1173 = vrot.lane.b32.xlu0 %v663, 64
        %v1174 = vpop.permute.xlu0 %1173
        %1175 = vrot.lane.b32.xlu0 %v668, 64
        %v1176 = vpop.permute.xlu0 %1175
        %1177 = vrot.lane.b32.xlu0 %v673, 64
        %v1178 = vpop.permute.xlu0 %1177
        %1179 = vrot.lane.b32.xlu0 %v678, 64
        %v1180 = vpop.permute.xlu0 %1179
        %1181 = vrot.lane.b32.xlu0 %v683, 64
        %v1182 = vpop.permute.xlu0 %1181
        %1183 = vrot.lane.b32.xlu0 %v688, 64
        %v1184 = vpop.permute.xlu0 %1183
        %1201 = vst.msk [vmem:[#allocation5] sm:$0xff] %vm862, %v1154
        %1202 = vst.msk [vmem:[#allocation5 + $0x8] sm:$0xff] %vm862, %v1156
        %1203 = vst.msk [vmem:[#allocation5 + $0x10] sm:$0xff] %vm862, %v1158
        %1204 = vst.msk [vmem:[#allocation5 + $0x18] sm:$0xff] %vm862, %v1160
        %1205 = vst.msk [vmem:[#allocation5 + $0x20] sm:$0xff] %vm862, %v1162
        %1206 = vst.msk [vmem:[#allocation5 + $0x28] sm:$0xff] %vm862, %v1164
        %1207 = vst.msk [vmem:[#allocation5 + $0x30] sm:$0xff] %vm862, %v1166
        %1208 = vst.msk [vmem:[#allocation5 + $0x38] sm:$0xff] %vm862, %v1168
        %1209 = vst.msk [vmem:[#allocation5 + $0x40] sm:$0xff] %vm862, %v1170
        %1210 = vst.msk [vmem:[#allocation5 + $0x48] sm:$0xff] %vm862, %v1172
        %1211 = vst.msk [vmem:[#allocation5 + $0x50] sm:$0xff] %vm862, %v1174
        %1212 = vst.msk [vmem:[#allocation5 + $0x58] sm:$0xff] %vm862, %v1176
        %1213 = vst.msk [vmem:[#allocation5 + $0x60] sm:$0xff] %vm862, %v1178
        %1214 = vst.msk [vmem:[#allocation5 + $0x68] sm:$0xff] %vm862, %v1180
        %1215 = vst.msk [vmem:[#allocation5 + $0x70] sm:$0xff] %vm862, %v1182
        %1216 = vst.msk [vmem:[#allocation5 + $0x78] sm:$0xff] %vm862, %v1184
        %1217 = vst.msk [vmem:[#allocation6] sm:$0xff] %vm862, 0.0
        %1218 = vst.msk [vmem:[#allocation6 + $0x8] sm:$0xff] %vm862, 0.0
        %1219 = vst.msk [vmem:[#allocation6 + $0x10] sm:$0xff] %vm862, 0.0
        %1220 = vst.msk [vmem:[#allocation6 + $0x18] sm:$0xff] %vm862, 0.0
        %1221 = vst.msk [vmem:[#allocation6 + $0x20] sm:$0xff] %vm862, 0.0
        %1222 = vst.msk [vmem:[#allocation6 + $0x28] sm:$0xff] %vm862, 0.0
        %1223 = vst.msk [vmem:[#allocation6 + $0x30] sm:$0xff] %vm862, 0.0
        %1224 = vst.msk [vmem:[#allocation6 + $0x38] sm:$0xff] %vm862, 0.0
        %1225 = vst.msk [vmem:[#allocation6 + $0x40] sm:$0xff] %vm862, 0.0
        %1226 = vst.msk [vmem:[#allocation6 + $0x48] sm:$0xff] %vm862, 0.0
        %1227 = vst.msk [vmem:[#allocation6 + $0x50] sm:$0xff] %vm862, 0.0
        %1228 = vst.msk [vmem:[#allocation6 + $0x58] sm:$0xff] %vm862, 0.0
        %1229 = vst.msk [vmem:[#allocation6 + $0x60] sm:$0xff] %vm862, 0.0
        %1230 = vst.msk [vmem:[#allocation6 + $0x68] sm:$0xff] %vm862, 0.0
        %1231 = vst.msk [vmem:[#allocation6 + $0x70] sm:$0xff] %vm862, 0.0
        %1232 = vst.msk [vmem:[#allocation6 + $0x78] sm:$0xff] %vm862, 0.0
      $region72: #{tpu_custom_call.1} parent=67 // pred_fallthru
        _
      %v1233 = vld [vmem:[%s453] sm:$0xf]
      %v1234 = vld [vmem:[%s453 + $0x4] sm:$0xf]
      %v1235 = vld [vmem:[%s453 + $0x8] sm:$0xf]
      %v1236 = vld [vmem:[%s453 + $0xc] sm:$0xf]
      %v1237 = vld [vmem:[%s453 + $0x10] sm:$0xf]
      %v1238 = vld [vmem:[%s453 + $0x14] sm:$0xf]
      %v1239 = vld [vmem:[%s453 + $0x18] sm:$0xf]
      %v1240 = vld [vmem:[%s453 + $0x1c] sm:$0xf]
      %v1241 = vld [vmem:[%s453 + $0x20] sm:$0xf]
      %v1242 = vld [vmem:[%s453 + $0x24] sm:$0xf]
      %v1243 = vld [vmem:[%s453 + $0x28] sm:$0xf]
      %v1244 = vld [vmem:[%s453 + $0x2c] sm:$0xf]
      %v1245 = vld [vmem:[%s453 + $0x30] sm:$0xf]
      %v1246 = vld [vmem:[%s453 + $0x34] sm:$0xf]
      %v1247 = vld [vmem:[%s453 + $0x38] sm:$0xf]
      %v1248 = vld [vmem:[%s453 + $0x3c] sm:$0xf]
      %v1249 = vld [vmem:[%s1] sm:$0xf]
      %v1250 = vld [vmem:[%s1 + $0x4] sm:$0xf]
      %v1251 = vld [vmem:[%s1 + $0x8] sm:$0xf]
      %v1252 = vld [vmem:[%s1 + $0xc] sm:$0xf]
      %v1253 = vld [vmem:[%s1 + $0x10] sm:$0xf]
      %v1254 = vld [vmem:[%s1 + $0x14] sm:$0xf]
      %v1255 = vld [vmem:[%s1 + $0x18] sm:$0xf]
      %v1256 = vld [vmem:[%s1 + $0x1c] sm:$0xf]
      %v1257 = vld [vmem:[%s1 + $0x20] sm:$0xf]
      %v1258 = vld [vmem:[%s1 + $0x24] sm:$0xf]
      %v1259 = vld [vmem:[%s1 + $0x28] sm:$0xf]
      %v1260 = vld [vmem:[%s1 + $0x2c] sm:$0xf]
      %v1261 = vld [vmem:[%s1 + $0x30] sm:$0xf]
      %v1262 = vld [vmem:[%s1 + $0x34] sm:$0xf]
      %v1263 = vld [vmem:[%s1 + $0x38] sm:$0xf]
      %v1264 = vld [vmem:[%s1 + $0x3c] sm:$0xf]
      %v1281 = vunpack.c.l.b16 %v1233
      %v1282 = vunpack.c.l.b16 %v1234
      %v1283 = vunpack.c.l.b16 %v1235
      %v1284 = vunpack.c.l.b16 %v1236
      %v1285 = vunpack.c.l.b16 %v1237
      %v1286 = vunpack.c.l.b16 %v1238
      %v1287 = vunpack.c.l.b16 %v1239
      %v1288 = vunpack.c.l.b16 %v1240
      %v1289 = vunpack.c.l.b16 %v1241
      %v1290 = vunpack.c.l.b16 %v1242
      %v1291 = vunpack.c.l.b16 %v1243
      %v1292 = vunpack.c.l.b16 %v1244
      %v1293 = vunpack.c.l.b16 %v1245
      %v1294 = vunpack.c.l.b16 %v1246
      %v1295 = vunpack.c.l.b16 %v1247
      %v1296 = vunpack.c.l.b16 %v1248
      %v1297 = vpack.c.b16 %v1282, %v1281
      %v1298 = vpack.c.b16 %v1284, %v1283
      %v1299 = vpack.c.b16 %v1286, %v1285
      %v1300 = vpack.c.b16 %v1288, %v1287
      %v1301 = vpack.c.b16 %v1290, %v1289
      %v1302 = vpack.c.b16 %v1292, %v1291
      %v1303 = vpack.c.b16 %v1294, %v1293
      %v1304 = vpack.c.b16 %v1296, %v1295
      %v1329 = vunpack.c.l.b16 %v1249
      %v1330 = vunpack.c.l.b16 %v1250
      %v1331 = vunpack.c.l.b16 %v1251
      %v1332 = vunpack.c.l.b16 %v1252
      %v1333 = vunpack.c.l.b16 %v1253
      %v1334 = vunpack.c.l.b16 %v1254
      %v1335 = vunpack.c.l.b16 %v1255
      %v1336 = vunpack.c.l.b16 %v1256
      %v1337 = vunpack.c.l.b16 %v1257
      %v1338 = vunpack.c.l.b16 %v1258
      %v1339 = vunpack.c.l.b16 %v1259
      %v1340 = vunpack.c.l.b16 %v1260
      %v1341 = vunpack.c.l.b16 %v1261
      %v1342 = vunpack.c.l.b16 %v1262
      %v1343 = vunpack.c.l.b16 %v1263
      %v1344 = vunpack.c.l.b16 %v1264
      %v1345 = vpack.c.b16 %v1330, %v1329
      %v1346 = vpack.c.b16 %v1332, %v1331
      %v1347 = vpack.c.b16 %v1334, %v1333
      %v1348 = vpack.c.b16 %v1336, %v1335
      %v1349 = vpack.c.b16 %v1338, %v1337
      %v1350 = vpack.c.b16 %v1340, %v1339
      %v1351 = vpack.c.b16 %v1342, %v1341
      %v1352 = vpack.c.b16 %v1344, %v1343
      %1361 = vmatprep.subr.bf16.mxu0 0
      %1362 = vmatpush1.bf16.msra.mxu0 %v1345
      %1363 = vmatprep.subr.bf16.mxu0 0
      %1364 = vmatpush1.bf16.msra.mxu0 %v1346
      %1365 = vmatprep.subr.bf16.mxu0 0
      %1366 = vmatpush1.bf16.msra.mxu0 %v1347
      %1367 = vmatprep.subr.bf16.mxu0 0
      %1368 = vmatpush1.bf16.msra.mxu0 %v1348
      %1369 = vmatprep.subr.bf16.mxu0 0
      %1370 = vmatpush1.bf16.msra.mxu0 %v1349
      %1371 = vmatprep.subr.bf16.mxu0 0
      %1372 = vmatpush1.bf16.msra.mxu0 %v1350
      %1373 = vmatprep.subr.bf16.mxu0 0
      %1374 = vmatpush1.bf16.msra.mxu0 %v1351
      %1375 = vmatprep.subr.bf16.mxu0 0
      %1376 = vmatpush1.bf16.msra.mxu0 %v1352
      %1377 = vmatprep.subr.bf16.mxu0 0
      %1378 = vmatpush1.bf16.msra.mxu0 0
      %1379 = vmatprep.subr.bf16.mxu0 0
      %1380 = vmatpush1.bf16.msra.mxu0 0
      %1381 = vmatprep.subr.bf16.mxu0 0
      %1382 = vmatpush1.bf16.msra.mxu0 0
      %1383 = vmatprep.subr.bf16.mxu0 0
      %1384 = vmatpush1.bf16.msra.mxu0 0
      %1385 = vmatprep.subr.bf16.mxu0 0
      %1386 = vmatpush1.bf16.msra.mxu0 0
      %1387 = vmatprep.subr.bf16.mxu0 0
      %1388 = vmatpush1.bf16.msra.mxu0 0
      %1389 = vmatprep.subr.bf16.mxu0 0
      %1390 = vmatpush1.bf16.msra.mxu0 0
      %1391 = vmatprep.subr.bf16.mxu0 0
      %1392 = vmatpush1.bf16.msra.mxu0 0
      %1393 = vmatprep.mubr.bf16.mxu0 0
      %1394 = vmatmul.mubr.bf16.gmra.mrb[0].mxu0 %v1297
      %v1395 = vpop.f32.mrb[0].mxu0
      %v1396 = vadd.f32 0.0, %v1395
      %v1397 = vpop.f32.mrb[0].mxu0
      %v1398 = vpop.f32.mrb[0].mxu0
      %v1399 = vadd.f32 0.0, %v1398
      %v1400 = vpop.f32.mrb[0].mxu0
      %1401 = vmatprep.mubr.bf16.mxu0 0
      %1402 = vmatmul.mubr.bf16.gmra.mrb[0].mxu0 %v1298
      %v1403 = vpop.f32.mrb[0].mxu0
      %v1404 = vadd.f32 0.0, %v1403
      %v1405 = vpop.f32.mrb[0].mxu0
      %v1406 = vpop.f32.mrb[0].mxu0
      %v1407 = vadd.f32 0.0, %v1406
      %v1408 = vpop.f32.mrb[0].mxu0
      %1409 = vmatprep.mubr.bf16.mxu0 0
      %1410 = vmatmul.mubr.bf16.gmra.mrb[0].mxu0 %v1299
      %v1411 = vpop.f32.mrb[0].mxu0
      %v1412 = vadd.f32 0.0, %v1411
      %v1413 = vpop.f32.mrb[0].mxu0
      %v1414 = vpop.f32.mrb[0].mxu0
      %v1415 = vadd.f32 0.0, %v1414
      %v1416 = vpop.f32.mrb[0].mxu0
      %1417 = vmatprep.mubr.bf16.mxu0 0
      %1418 = vmatmul.mubr.bf16.gmra.mrb[0].mxu0 %v1300
      %v1419 = vpop.f32.mrb[0].mxu0
      %v1420 = vadd.f32 0.0, %v1419
      %v1421 = vpop.f32.mrb[0].mxu0
      %v1422 = vpop.f32.mrb[0].mxu0
      %v1423 = vadd.f32 0.0, %v1422
      %v1424 = vpop.f32.mrb[0].mxu0
      %1425 = vmatprep.mubr.bf16.mxu0 0
      %1426 = vmatmul.mubr.bf16.gmra.mrb[0].mxu0 %v1301
      %v1427 = vpop.f32.mrb[0].mxu0
      %v1428 = vadd.f32 0.0, %v1427
      %v1429 = vpop.f32.mrb[0].mxu0
      %v1430 = vpop.f32.mrb[0].mxu0
      %v1431 = vadd.f32 0.0, %v1430
      %v1432 = vpop.f32.mrb[0].mxu0
      %1433 = vmatprep.mubr.bf16.mxu0 0
      %1434 = vmatmul.mubr.bf16.gmra.mrb[0].mxu0 %v1302
      %v1435 = vpop.f32.mrb[0].mxu0
      %v1436 = vadd.f32 0.0, %v1435
      %v1437 = vpop.f32.mrb[0].mxu0
      %v1438 = vpop.f32.mrb[0].mxu0
      %v1439 = vadd.f32 0.0, %v1438
      %v1440 = vpop.f32.mrb[0].mxu0
      %1441 = vmatprep.mubr.bf16.mxu0 0
      %1442 = vmatmul.mubr.bf16.gmra.mrb[0].mxu0 %v1303
      %v1443 = vpop.f32.mrb[0].mxu0
      %v1444 = vadd.f32 0.0, %v1443
      %v1445 = vpop.f32.mrb[0].mxu0
      %v1446 = vpop.f32.mrb[0].mxu0
      %v1447 = vadd.f32 0.0, %v1446
      %v1448 = vpop.f32.mrb[0].mxu0
      %1449 = vmatprep.mubr.bf16.mxu0 0
      %1450 = vmatmul.mubr.bf16.gmra.mrb[0].mxu0 %v1304
      %v1451 = vpop.f32.mrb[0].mxu0
      %v1452 = vadd.f32 0.0, %v1451
      %v1453 = vpop.f32.mrb[0].mxu0
      %v1454 = vpop.f32.mrb[0].mxu0
      %v1455 = vadd.f32 0.0, %v1454
      %v1456 = vpop.f32.mrb[0].mxu0
      %1457 = vdwg.mxu0
      %v1458 = vld [vmem:[#allocation4] sm:$0xff]
      %v1459 = vld [vmem:[#allocation4 + $0x8] sm:$0xff]
      %v1460 = vld [vmem:[#allocation4 + $0x10] sm:$0xff]
      %v1461 = vld [vmem:[#allocation4 + $0x18] sm:$0xff]
      %v1462 = vld [vmem:[#allocation4 + $0x20] sm:$0xff]
      %v1463 = vld [vmem:[#allocation4 + $0x28] sm:$0xff]
      %v1464 = vld [vmem:[#allocation4 + $0x30] sm:$0xff]
      %v1465 = vld [vmem:[#allocation4 + $0x38] sm:$0xff]
      %v1466 = vld [vmem:[#allocation4 + $0x40] sm:$0xff]
      %v1467 = vld [vmem:[#allocation4 + $0x48] sm:$0xff]
      %v1468 = vld [vmem:[#allocation4 + $0x50] sm:$0xff]
      %v1469 = vld [vmem:[#allocation4 + $0x58] sm:$0xff]
      %v1470 = vld [vmem:[#allocation4 + $0x60] sm:$0xff]
      %v1471 = vld [vmem:[#allocation4 + $0x68] sm:$0xff]
      %v1472 = vld [vmem:[#allocation4 + $0x70] sm:$0xff]
      %v1473 = vld [vmem:[#allocation4 + $0x78] sm:$0xff]
      %1475 = vset.pattern.permute.xlu0 0
      %1476 = vperm.xlu0 %1475, %v1458
      %v1477 = vpop.permute.xlu0 %1476
      %1480 = vset.pattern.permute.xlu0 0
      %1481 = vperm.xlu0 %1480, %v1459
      %v1482 = vpop.permute.xlu0 %1481
      %1485 = vset.pattern.permute.xlu0 0
      %1486 = vperm.xlu0 %1485, %v1460
      %v1487 = vpop.permute.xlu0 %1486
      %1490 = vset.pattern.permute.xlu0 0
      %1491 = vperm.xlu0 %1490, %v1461
      %v1492 = vpop.permute.xlu0 %1491
      %1495 = vset.pattern.permute.xlu0 0
      %1496 = vperm.xlu0 %1495, %v1462
      %v1497 = vpop.permute.xlu0 %1496
      %1500 = vset.pattern.permute.xlu0 0
      %1501 = vperm.xlu0 %1500, %v1463
      %v1502 = vpop.permute.xlu0 %1501
      %1505 = vset.pattern.permute.xlu0 0
      %1506 = vperm.xlu0 %1505, %v1464
      %v1507 = vpop.permute.xlu0 %1506
      %1510 = vset.pattern.permute.xlu0 0
      %1511 = vperm.xlu0 %1510, %v1465
      %v1512 = vpop.permute.xlu0 %1511
      %1515 = vset.pattern.permute.xlu0 0
      %1516 = vperm.xlu0 %1515, %v1466
      %v1517 = vpop.permute.xlu0 %1516
      %1520 = vset.pattern.permute.xlu0 0
      %1521 = vperm.xlu0 %1520, %v1467
      %v1522 = vpop.permute.xlu0 %1521
      %1525 = vset.pattern.permute.xlu0 0
      %1526 = vperm.xlu0 %1525, %v1468
      %v1527 = vpop.permute.xlu0 %1526
      %1530 = vset.pattern.permute.xlu0 0
      %1531 = vperm.xlu0 %1530, %v1469
      %v1532 = vpop.permute.xlu0 %1531
      %1535 = vset.pattern.permute.xlu0 0
      %1536 = vperm.xlu0 %1535, %v1470
      %v1537 = vpop.permute.xlu0 %1536
      %1540 = vset.pattern.permute.xlu0 0
      %1541 = vperm.xlu0 %1540, %v1471
      %v1542 = vpop.permute.xlu0 %1541
      %1545 = vset.pattern.permute.xlu0 0
      %1546 = vperm.xlu0 %1545, %v1472
      %v1547 = vpop.permute.xlu0 %1546
      %1550 = vset.pattern.permute.xlu0 0
      %1551 = vperm.xlu0 %1550, %v1473
      %v1552 = vpop.permute.xlu0 %1551
      %v1554 = vmul.f32 %v1477, %v1396
      %v1555 = vmul.f32 %v1482, %v1399
      %v1556 = vmul.f32 %v1487, %v1404
      %v1557 = vmul.f32 %v1492, %v1407
      %v1558 = vmul.f32 %v1497, %v1412
      %v1559 = vmul.f32 %v1502, %v1415
      %v1560 = vmul.f32 %v1507, %v1420
      %v1561 = vmul.f32 %v1512, %v1423
      %v1562 = vmul.f32 %v1517, %v1428
      %v1563 = vmul.f32 %v1522, %v1431
      %v1564 = vmul.f32 %v1527, %v1436
      %v1565 = vmul.f32 %v1532, %v1439
      %v1566 = vmul.f32 %v1537, %v1444
      %v1567 = vmul.f32 %v1542, %v1447
      %v1568 = vmul.f32 %v1547, %v1452
      %v1569 = vmul.f32 %v1552, %v1455
      %1586 = vrot.lane.b32.xlu0 %v1554, 96
      %v1587 = vpop.permute.xlu0 %1586
      %1588 = vrot.lane.b32.xlu0 %v1555, 96
      %v1589 = vpop.permute.xlu0 %1588
      %1590 = vrot.lane.b32.xlu0 %v1556, 96
      %v1591 = vpop.permute.xlu0 %1590
      %1592 = vrot.lane.b32.xlu0 %v1557, 96
      %v1593 = vpop.permute.xlu0 %1592
      %1594 = vrot.lane.b32.xlu0 %v1558, 96
      %v1595 = vpop.permute.xlu0 %1594
      %1596 = vrot.lane.b32.xlu0 %v1559, 96
      %v1597 = vpop.permute.xlu0 %1596
      %1598 = vrot.lane.b32.xlu0 %v1560, 96
      %v1599 = vpop.permute.xlu0 %1598
      %1600 = vrot.lane.b32.xlu0 %v1561, 96
      %v1601 = vpop.permute.xlu0 %1600
      %1602 = vrot.lane.b32.xlu0 %v1562, 96
      %v1603 = vpop.permute.xlu0 %1602
      %1604 = vrot.lane.b32.xlu0 %v1563, 96
      %v1605 = vpop.permute.xlu0 %1604
      %1606 = vrot.lane.b32.xlu0 %v1564, 96
      %v1607 = vpop.permute.xlu0 %1606
      %1608 = vrot.lane.b32.xlu0 %v1565, 96
      %v1609 = vpop.permute.xlu0 %1608
      %1610 = vrot.lane.b32.xlu0 %v1566, 96
      %v1611 = vpop.permute.xlu0 %1610
      %1612 = vrot.lane.b32.xlu0 %v1567, 96
      %v1613 = vpop.permute.xlu0 %1612
      %1614 = vrot.lane.b32.xlu0 %v1568, 96
      %v1615 = vpop.permute.xlu0 %1614
      %1616 = vrot.lane.b32.xlu0 %v1569, 96
      %v1617 = vpop.permute.xlu0 %1616
      %v1634 = vadd.f32 %v1396, %v1587
      %v1635 = vadd.f32 %v1399, %v1589
      %v1636 = vadd.f32 %v1404, %v1591
      %v1637 = vadd.f32 %v1407, %v1593
      %v1638 = vadd.f32 %v1412, %v1595
      %v1639 = vadd.f32 %v1415, %v1597
      %v1640 = vadd.f32 %v1420, %v1599
      %v1641 = vadd.f32 %v1423, %v1601
      %v1642 = vadd.f32 %v1428, %v1603
      %v1643 = vadd.f32 %v1431, %v1605
      %v1644 = vadd.f32 %v1436, %v1607
      %v1645 = vadd.f32 %v1439, %v1609
      %v1646 = vadd.f32 %v1444, %v1611
      %v1647 = vadd.f32 %v1447, %v1613
      %v1648 = vadd.f32 %v1452, %v1615
      %v1649 = vadd.f32 %v1455, %v1617
      %v1650 = vld [vmem:[#allocation2] sm:$0xff]
      %v1651 = vld [vmem:[#allocation2 + $0x8] sm:$0xff]
      %v1652 = vld [vmem:[#allocation2 + $0x10] sm:$0xff]
      %v1653 = vld [vmem:[#allocation2 + $0x18] sm:$0xff]
      %v1654 = vld [vmem:[#allocation2 + $0x20] sm:$0xff]
      %v1655 = vld [vmem:[#allocation2 + $0x28] sm:$0xff]
      %v1656 = vld [vmem:[#allocation2 + $0x30] sm:$0xff]
      %v1657 = vld [vmem:[#allocation2 + $0x38] sm:$0xff]
      %v1658 = vld [vmem:[#allocation2 + $0x40] sm:$0xff]
      %v1659 = vld [vmem:[#allocation2 + $0x48] sm:$0xff]
      %v1660 = vld [vmem:[#allocation2 + $0x50] sm:$0xff]
      %v1661 = vld [vmem:[#allocation2 + $0x58] sm:$0xff]
      %v1662 = vld [vmem:[#allocation2 + $0x60] sm:$0xff]
      %v1663 = vld [vmem:[#allocation2 + $0x68] sm:$0xff]
      %v1664 = vld [vmem:[#allocation2 + $0x70] sm:$0xff]
      %v1665 = vld [vmem:[#allocation2 + $0x78] sm:$0xff]
      %v1666 = vmul.f32 %v1634, %v1650
      %v1667 = vmul.f32 %v1635, %v1651
      %v1668 = vmul.f32 %v1636, %v1652
      %v1669 = vmul.f32 %v1637, %v1653
      %v1670 = vmul.f32 %v1638, %v1654
      %v1671 = vmul.f32 %v1639, %v1655
      %v1672 = vmul.f32 %v1640, %v1656
      %v1673 = vmul.f32 %v1641, %v1657
      %v1674 = vmul.f32 %v1642, %v1658
      %v1675 = vmul.f32 %v1643, %v1659
      %v1676 = vmul.f32 %v1644, %v1660
      %v1677 = vmul.f32 %v1645, %v1661
      %v1678 = vmul.f32 %v1646, %v1662
      %v1679 = vmul.f32 %v1647, %v1663
      %v1680 = vmul.f32 %v1648, %v1664
      %v1681 = vmul.f32 %v1649, %v1665
      %v1682 = vsub.f32 1.0, %v1458
      %v1683 = vsub.f32 1.0, %v1459
      %v1684 = vsub.f32 1.0, %v1460
      %v1685 = vsub.f32 1.0, %v1461
      %v1686 = vsub.f32 1.0, %v1462
      %v1687 = vsub.f32 1.0, %v1463
      %v1688 = vsub.f32 1.0, %v1464
      %v1689 = vsub.f32 1.0, %v1465
      %v1690 = vsub.f32 1.0, %v1466
      %v1691 = vsub.f32 1.0, %v1467
      %v1692 = vsub.f32 1.0, %v1468
      %v1693 = vsub.f32 1.0, %v1469
      %v1694 = vsub.f32 1.0, %v1470
      %v1695 = vsub.f32 1.0, %v1471
      %v1696 = vsub.f32 1.0, %v1472
      %v1697 = vsub.f32 1.0, %v1473
      %1699 = vset.pattern.permute.xlu0 0
      %1700 = vperm.xlu0 %1699, %v1682
      %v1701 = vpop.permute.xlu0 %1700
      %1704 = vset.pattern.permute.xlu0 0
      %1705 = vperm.xlu0 %1704, %v1683
      %v1706 = vpop.permute.xlu0 %1705
      %1709 = vset.pattern.permute.xlu0 0
      %1710 = vperm.xlu0 %1709, %v1684
      %v1711 = vpop.permute.xlu0 %1710
      %1714 = vset.pattern.permute.xlu0 0
      %1715 = vperm.xlu0 %1714, %v1685
      %v1716 = vpop.permute.xlu0 %1715
      %1719 = vset.pattern.permute.xlu0 0
      %1720 = vperm.xlu0 %1719, %v1686
      %v1721 = vpop.permute.xlu0 %1720
      %1724 = vset.pattern.permute.xlu0 0
      %1725 = vperm.xlu0 %1724, %v1687
      %v1726 = vpop.permute.xlu0 %1725
      %1729 = vset.pattern.permute.xlu0 0
      %1730 = vperm.xlu0 %1729, %v1688
      %v1731 = vpop.permute.xlu0 %1730
      %1734 = vset.pattern.permute.xlu0 0
      %1735 = vperm.xlu0 %1734, %v1689
      %v1736 = vpop.permute.xlu0 %1735
      %1739 = vset.pattern.permute.xlu0 0
      %1740 = vperm.xlu0 %1739, %v1690
      %v1741 = vpop.permute.xlu0 %1740
      %1744 = vset.pattern.permute.xlu0 0
      %1745 = vperm.xlu0 %1744, %v1691
      %v1746 = vpop.permute.xlu0 %1745
      %1749 = vset.pattern.permute.xlu0 0
      %1750 = vperm.xlu0 %1749, %v1692
      %v1751 = vpop.permute.xlu0 %1750
      %1754 = vset.pattern.permute.xlu0 0
      %1755 = vperm.xlu0 %1754, %v1693
      %v1756 = vpop.permute.xlu0 %1755
      %1759 = vset.pattern.permute.xlu0 0
      %1760 = vperm.xlu0 %1759, %v1694
      %v1761 = vpop.permute.xlu0 %1760
      %1764 = vset.pattern.permute.xlu0 0
      %1765 = vperm.xlu0 %1764, %v1695
      %v1766 = vpop.permute.xlu0 %1765
      %1769 = vset.pattern.permute.xlu0 0
      %1770 = vperm.xlu0 %1769, %v1696
      %v1771 = vpop.permute.xlu0 %1770
      %1774 = vset.pattern.permute.xlu0 0
      %1775 = vperm.xlu0 %1774, %v1697
      %v1776 = vpop.permute.xlu0 %1775
      %v1778 = vmul.f32 %v1701, %v1396
      %v1779 = vmul.f32 %v1706, %v1399
      %v1780 = vmul.f32 %v1711, %v1404
      %v1781 = vmul.f32 %v1716, %v1407
      %v1782 = vmul.f32 %v1721, %v1412
      %v1783 = vmul.f32 %v1726, %v1415
      %v1784 = vmul.f32 %v1731, %v1420
      %v1785 = vmul.f32 %v1736, %v1423
      %v1786 = vmul.f32 %v1741, %v1428
      %v1787 = vmul.f32 %v1746, %v1431
      %v1788 = vmul.f32 %v1751, %v1436
      %v1789 = vmul.f32 %v1756, %v1439
      %v1790 = vmul.f32 %v1761, %v1444
      %v1791 = vmul.f32 %v1766, %v1447
      %v1792 = vmul.f32 %v1771, %v1452
      %v1793 = vmul.f32 %v1776, %v1455
      %1810 = vrot.lane.b32.xlu0 %v1778, 112
      %v1811 = vpop.permute.xlu0 %1810
      %1812 = vrot.lane.b32.xlu0 %v1779, 112
      %v1813 = vpop.permute.xlu0 %1812
      %1814 = vrot.lane.b32.xlu0 %v1780, 112
      %v1815 = vpop.permute.xlu0 %1814
      %1816 = vrot.lane.b32.xlu0 %v1781, 112
      %v1817 = vpop.permute.xlu0 %1816
      %1818 = vrot.lane.b32.xlu0 %v1782, 112
      %v1819 = vpop.permute.xlu0 %1818
      %1820 = vrot.lane.b32.xlu0 %v1783, 112
      %v1821 = vpop.permute.xlu0 %1820
      %1822 = vrot.lane.b32.xlu0 %v1784, 112
      %v1823 = vpop.permute.xlu0 %1822
      %1824 = vrot.lane.b32.xlu0 %v1785, 112
      %v1825 = vpop.permute.xlu0 %1824
      %1826 = vrot.lane.b32.xlu0 %v1786, 112
      %v1827 = vpop.permute.xlu0 %1826
      %1828 = vrot.lane.b32.xlu0 %v1787, 112
      %v1829 = vpop.permute.xlu0 %1828
      %1830 = vrot.lane.b32.xlu0 %v1788, 112
      %v1831 = vpop.permute.xlu0 %1830
      %1832 = vrot.lane.b32.xlu0 %v1789, 112
      %v1833 = vpop.permute.xlu0 %1832
      %1834 = vrot.lane.b32.xlu0 %v1790, 112
      %v1835 = vpop.permute.xlu0 %1834
      %1836 = vrot.lane.b32.xlu0 %v1791, 112
      %v1837 = vpop.permute.xlu0 %1836
      %1838 = vrot.lane.b32.xlu0 %v1792, 112
      %v1839 = vpop.permute.xlu0 %1838
      %1840 = vrot.lane.b32.xlu0 %v1793, 112
      %v1841 = vpop.permute.xlu0 %1840
      %v1858 = vadd.f32 %v1396, %v1811
      %v1859 = vadd.f32 %v1399, %v1813
      %v1860 = vadd.f32 %v1404, %v1815
      %v1861 = vadd.f32 %v1407, %v1817
      %v1862 = vadd.f32 %v1412, %v1819
      %v1863 = vadd.f32 %v1415, %v1821
      %v1864 = vadd.f32 %v1420, %v1823
      %v1865 = vadd.f32 %v1423, %v1825
      %v1866 = vadd.f32 %v1428, %v1827
      %v1867 = vadd.f32 %v1431, %v1829
      %v1868 = vadd.f32 %v1436, %v1831
      %v1869 = vadd.f32 %v1439, %v1833
      %v1870 = vadd.f32 %v1444, %v1835
      %v1871 = vadd.f32 %v1447, %v1837
      %v1872 = vadd.f32 %v1452, %v1839
      %v1873 = vadd.f32 %v1455, %v1841
      %v1874 = vld [vmem:[#allocation3] sm:$0xff]
      %v1875 = vld [vmem:[#allocation3 + $0x8] sm:$0xff]
      %v1876 = vld [vmem:[#allocation3 + $0x10] sm:$0xff]
      %v1877 = vld [vmem:[#allocation3 + $0x18] sm:$0xff]
      %v1878 = vld [vmem:[#allocation3 + $0x20] sm:$0xff]
      %v1879 = vld [vmem:[#allocation3 + $0x28] sm:$0xff]
      %v1880 = vld [vmem:[#allocation3 + $0x30] sm:$0xff]
      %v1881 = vld [vmem:[#allocation3 + $0x38] sm:$0xff]
      %v1882 = vld [vmem:[#allocation3 + $0x40] sm:$0xff]
      %v1883 = vld [vmem:[#allocation3 + $0x48] sm:$0xff]
      %v1884 = vld [vmem:[#allocation3 + $0x50] sm:$0xff]
      %v1885 = vld [vmem:[#allocation3 + $0x58] sm:$0xff]
      %v1886 = vld [vmem:[#allocation3 + $0x60] sm:$0xff]
      %v1887 = vld [vmem:[#allocation3 + $0x68] sm:$0xff]
      %v1888 = vld [vmem:[#allocation3 + $0x70] sm:$0xff]
      %v1889 = vld [vmem:[#allocation3 + $0x78] sm:$0xff]
      %1906 = vrot.lane.b32.xlu0 %v1874, 16
      %v1907 = vpop.permute.xlu0 %1906
      %1908 = vrot.lane.b32.xlu0 %v1875, 16
      %v1909 = vpop.permute.xlu0 %1908
      %1910 = vrot.lane.b32.xlu0 %v1876, 16
      %v1911 = vpop.permute.xlu0 %1910
      %1912 = vrot.lane.b32.xlu0 %v1877, 16
      %v1913 = vpop.permute.xlu0 %1912
      %1914 = vrot.lane.b32.xlu0 %v1878, 16
      %v1915 = vpop.permute.xlu0 %1914
      %1916 = vrot.lane.b32.xlu0 %v1879, 16
      %v1917 = vpop.permute.xlu0 %1916
      %1918 = vrot.lane.b32.xlu0 %v1880, 16
      %v1919 = vpop.permute.xlu0 %1918
      %1920 = vrot.lane.b32.xlu0 %v1881, 16
      %v1921 = vpop.permute.xlu0 %1920
      %1922 = vrot.lane.b32.xlu0 %v1882, 16
      %v1923 = vpop.permute.xlu0 %1922
      %1924 = vrot.lane.b32.xlu0 %v1883, 16
      %v1925 = vpop.permute.xlu0 %1924
      %1926 = vrot.lane.b32.xlu0 %v1884, 16
      %v1927 = vpop.permute.xlu0 %1926
      %1928 = vrot.lane.b32.xlu0 %v1885, 16
      %v1929 = vpop.permute.xlu0 %1928
      %1930 = vrot.lane.b32.xlu0 %v1886, 16
      %v1931 = vpop.permute.xlu0 %1930
      %1932 = vrot.lane.b32.xlu0 %v1887, 16
      %v1933 = vpop.permute.xlu0 %1932
      %1934 = vrot.lane.b32.xlu0 %v1888, 16
      %v1935 = vpop.permute.xlu0 %1934
      %1936 = vrot.lane.b32.xlu0 %v1889, 16
      %v1937 = vpop.permute.xlu0 %1936
      %v1954 = vmul.f32 %v1858, %v1907
      %v1955 = vmul.f32 %v1859, %v1909
      %v1956 = vmul.f32 %v1860, %v1911
      %v1957 = vmul.f32 %v1861, %v1913
      %v1958 = vmul.f32 %v1862, %v1915
      %v1959 = vmul.f32 %v1863, %v1917
      %v1960 = vmul.f32 %v1864, %v1919
      %v1961 = vmul.f32 %v1865, %v1921
      %v1962 = vmul.f32 %v1866, %v1923
      %v1963 = vmul.f32 %v1867, %v1925
      %v1964 = vmul.f32 %v1868, %v1927
      %v1965 = vmul.f32 %v1869, %v1929
      %v1966 = vmul.f32 %v1870, %v1931
      %v1967 = vmul.f32 %v1871, %v1933
      %v1968 = vmul.f32 %v1872, %v1935
      %v1969 = vmul.f32 %v1873, %v1937
      %vm1970 = vcmask 130048
      %v1971 = vsel %vm1970, %v1666, %v1954
      %v1972 = vsel %vm1970, %v1667, %v1955
      %v1973 = vsel %vm1970, %v1668, %v1956
      %v1974 = vsel %vm1970, %v1669, %v1957
      %v1975 = vsel %vm1970, %v1670, %v1958
      %v1976 = vsel %vm1970, %v1671, %v1959
      %v1977 = vsel %vm1970, %v1672, %v1960
      %v1978 = vsel %vm1970, %v1673, %v1961
      %v1979 = vsel %vm1970, %v1674, %v1962
      %v1980 = vsel %vm1970, %v1675, %v1963
      %v1981 = vsel %vm1970, %v1676, %v1964
      %v1982 = vsel %vm1970, %v1677, %v1965
      %v1983 = vsel %vm1970, %v1678, %v1966
      %v1984 = vsel %vm1970, %v1679, %v1967
      %v1985 = vsel %vm1970, %v1680, %v1968
      %v1986 = vsel %vm1970, %v1681, %v1969
      %v1987 = vld [vmem:[%s7] sm:$0xff]
      %v1988 = vld [vmem:[%s7 + $0x8] sm:$0xff]
      %v1989 = vld [vmem:[%s7 + $0x10] sm:$0xff]
      %v1990 = vld [vmem:[%s7 + $0x18] sm:$0xff]
      %v1991 = vadd.f32 %v1458, 1.0
      %v1992 = vadd.f32 %v1459, 1.0
      %v1993 = vadd.f32 %v1460, 1.0
      %v1994 = vadd.f32 %v1461, 1.0
      %v1995 = vadd.f32 %v1462, 1.0
      %v1996 = vadd.f32 %v1463, 1.0
      %v1997 = vadd.f32 %v1464, 1.0
      %v1998 = vadd.f32 %v1465, 1.0
      %v1999 = vadd.f32 %v1466, 1.0
      %v2000 = vadd.f32 %v1467, 1.0
      %v2001 = vadd.f32 %v1468, 1.0
      %v2002 = vadd.f32 %v1469, 1.0
      %v2003 = vadd.f32 %v1470, 1.0
      %v2004 = vadd.f32 %v1471, 1.0
      %v2005 = vadd.f32 %v1472, 1.0
      %v2006 = vadd.f32 %v1473, 1.0
      %v2007 = vld [vmem:[%s8] sm:$0x1]
      %2009 = vset.pattern.permute.xlu0 0
      %2010 = vperm.xlu0 %2009, %v1991
      %v2011 = vpop.permute.xlu0 %2010
      %2014 = vset.pattern.permute.xlu0 0
      %2015 = vperm.xlu0 %2014, %v1992
      %v2016 = vpop.permute.xlu0 %2015
      %2019 = vset.pattern.permute.xlu0 0
      %2020 = vperm.xlu0 %2019, %v1993
      %v2021 = vpop.permute.xlu0 %2020
      %2024 = vset.pattern.permute.xlu0 0
      %2025 = vperm.xlu0 %2024, %v1994
      %v2026 = vpop.permute.xlu0 %2025
      %2029 = vset.pattern.permute.xlu0 0
      %2030 = vperm.xlu0 %2029, %v1995
      %v2031 = vpop.permute.xlu0 %2030
      %2034 = vset.pattern.permute.xlu0 0
      %2035 = vperm.xlu0 %2034, %v1996
      %v2036 = vpop.permute.xlu0 %2035
      %2039 = vset.pattern.permute.xlu0 0
      %2040 = vperm.xlu0 %2039, %v1997
      %v2041 = vpop.permute.xlu0 %2040
      %2044 = vset.pattern.permute.xlu0 0
      %2045 = vperm.xlu0 %2044, %v1998
      %v2046 = vpop.permute.xlu0 %2045
      %2049 = vset.pattern.permute.xlu0 0
      %2050 = vperm.xlu0 %2049, %v1999
      %v2051 = vpop.permute.xlu0 %2050
      %2054 = vset.pattern.permute.xlu0 0
      %2055 = vperm.xlu0 %2054, %v2000
      %v2056 = vpop.permute.xlu0 %2055
      %2059 = vset.pattern.permute.xlu0 0
      %2060 = vperm.xlu0 %2059, %v2001
      %v2061 = vpop.permute.xlu0 %2060
      %2064 = vset.pattern.permute.xlu0 0
      %2065 = vperm.xlu0 %2064, %v2002
      %v2066 = vpop.permute.xlu0 %2065
      %2069 = vset.pattern.permute.xlu0 0
      %2070 = vperm.xlu0 %2069, %v2003
      %v2071 = vpop.permute.xlu0 %2070
      %2074 = vset.pattern.permute.xlu0 0
      %2075 = vperm.xlu0 %2074, %v2004
      %v2076 = vpop.permute.xlu0 %2075
      %2079 = vset.pattern.permute.xlu0 0
      %2080 = vperm.xlu0 %2079, %v2005
      %v2081 = vpop.permute.xlu0 %2080
      %2084 = vset.pattern.permute.xlu0 0
      %2085 = vperm.xlu0 %2084, %v2006
      %v2086 = vpop.permute.xlu0 %2085
      %v2089 = vlaneseq
      %v2090 = vshrl.u32 %v2089, 7
      %v2091 = vsub.s32 0, %v2090
      %v2092 = vrot.slane %v2007, %v2091
      %v2094 = vmul.f32 %v2011, %v2092
      %v2095 = vmul.f32 %v2016, %v2092
      %v2096 = vmul.f32 %v2021, %v2092
      %v2097 = vmul.f32 %v2026, %v2092
      %v2098 = vmul.f32 %v2031, %v2092
      %v2099 = vmul.f32 %v2036, %v2092
      %v2100 = vmul.f32 %v2041, %v2092
      %v2101 = vmul.f32 %v2046, %v2092
      %v2102 = vmul.f32 %v2051, %v2092
      %v2103 = vmul.f32 %v2056, %v2092
      %v2104 = vmul.f32 %v2061, %v2092
      %v2105 = vmul.f32 %v2066, %v2092
      %v2106 = vmul.f32 %v2071, %v2092
      %v2107 = vmul.f32 %v2076, %v2092
      %v2108 = vmul.f32 %v2081, %v2092
      %v2109 = vmul.f32 %v2086, %v2092
      %vm2110 = vcmask 261120
      %v2112 = vsel %vm2110, %v1971, 0
      %v2115 = vsel %vm2110, %v1972, 0
      %v2118 = vsel %vm2110, %v1973, 0
      %v2121 = vsel %vm2110, %v1974, 0
      %v2124 = vsel %vm2110, %v1975, 0
      %v2127 = vsel %vm2110, %v1976, 0
      %v2130 = vsel %vm2110, %v1977, 0
      %v2133 = vsel %vm2110, %v1978, 0
      %v2136 = vsel %vm2110, %v1979, 0
      %v2139 = vsel %vm2110, %v1980, 0
      %v2142 = vsel %vm2110, %v1981, 0
      %v2145 = vsel %vm2110, %v1982, 0
      %v2148 = vsel %vm2110, %v1983, 0
      %v2151 = vsel %vm2110, %v1984, 0
      %v2154 = vsel %vm2110, %v1985, 0
      %v2157 = vsel %vm2110, %v1986, 0
      %2159 = vmatprep.subr.mxu0 0.0
      %2160 = vmatpush1.msra.mxu0 %v1987
      %2161 = vmatprep.subr.mxu0 0.0
      %2162 = vmatpush1.msra.mxu0 %v1988
      %2163 = vmatprep.subr.mxu0 0.0
      %2164 = vmatpush1.msra.mxu0 %v1989
      %2165 = vmatprep.subr.mxu0 0.0
      %2166 = vmatpush1.msra.mxu0 %v1990
      %2167 = vmatprep.subr.mxu0 0.0
      %2168 = vmatpush1.msra.mxu0 0.0
      %2169 = vmatprep.subr.mxu0 0.0
      %2170 = vmatpush1.msra.mxu0 0.0
      %2171 = vmatprep.subr.mxu0 0.0
      %2172 = vmatpush1.msra.mxu0 0.0
      %2173 = vmatprep.subr.mxu0 0.0
      %2174 = vmatpush1.msra.mxu0 0.0
      %2175 = vmatprep.subr.mxu0 0.0
      %2176 = vmatpush1.msra.mxu0 0.0
      %2177 = vmatprep.subr.mxu0 0.0
      %2178 = vmatpush1.msra.mxu0 0.0
      %2179 = vmatprep.subr.mxu0 0.0
      %2180 = vmatpush1.msra.mxu0 0.0
      %2181 = vmatprep.subr.mxu0 0.0
      %2182 = vmatpush1.msra.mxu0 0.0
      %2183 = vmatprep.subr.mxu0 0.0
      %2184 = vmatpush1.msra.mxu0 0.0
      %2185 = vmatprep.subr.mxu0 0.0
      %2186 = vmatpush1.msra.mxu0 0.0
      %2187 = vmatprep.subr.mxu0 0.0
      %2188 = vmatpush1.msra.mxu0 0.0
      %2189 = vmatprep.subr.mxu0 0.0
      %2190 = vmatpush1.msra.mxu0 0.0
      %2191 = vmatprep.subr.mxu0 0.0
      %2192 = vmatpush1.msra.mxu0 0.0
      %2193 = vmatprep.subr.mxu0 0.0
      %2194 = vmatpush1.msra.mxu0 0.0
      %2195 = vmatprep.subr.mxu0 0.0
      %2196 = vmatpush1.msra.mxu0 0.0
      %2197 = vmatprep.subr.mxu0 0.0
      %2198 = vmatpush1.msra.mxu0 0.0
      %2199 = vmatprep.subr.mxu0 0.0
      %2200 = vmatpush1.msra.mxu0 0.0
      %2201 = vmatprep.subr.mxu0 0.0
      %2202 = vmatpush1.msra.mxu0 0.0
      %2203 = vmatprep.subr.mxu0 0.0
      %2204 = vmatpush1.msra.mxu0 0.0
      %2205 = vmatprep.subr.mxu0 0.0
      %2206 = vmatpush1.msra.mxu0 0.0
      %2207 = vmatprep.subr.mxu0 0.0
      %2208 = vmatpush1.msra.mxu0 0.0
      %2209 = vmatprep.subr.mxu0 0.0
      %2210 = vmatpush1.msra.mxu0 0.0
      %2211 = vmatprep.subr.mxu0 0.0
      %2212 = vmatpush1.msra.mxu0 0.0
      %2213 = vmatprep.subr.mxu0 0.0
      %2214 = vmatpush1.msra.mxu0 0.0
      %2215 = vmatprep.subr.mxu0 0.0
      %2216 = vmatpush1.msra.mxu0 0.0
      %2217 = vmatprep.subr.mxu0 0.0
      %2218 = vmatpush1.msra.mxu0 0.0
      %2219 = vmatprep.subr.mxu0 0.0
      %2220 = vmatpush1.msra.mxu0 0.0
      %2221 = vmatprep.subr.mxu0 0.0
      %2222 = vmatpush1.msra.mxu0 0.0
      %2223 = vmatprep.mubr.f32.mxu0 0.0
      %2224 = vmatmul.mubr.f32.gmra.mrb[0].mxu0 %v2112
      %v2225 = vpop.f32.mrb[0].mxu0
      %v2226 = vadd.f32 %v2094, %v2225
      %v2227 = vpop.f32.mrb[0].mxu0
      %2228 = vmatprep.mubr.f32.mxu0 0.0
      %2229 = vmatmul.mubr.f32.gmra.mrb[0].mxu0 %v2115
      %v2230 = vpop.f32.mrb[0].mxu0
      %v2231 = vadd.f32 %v2095, %v2230
      %v2232 = vpop.f32.mrb[0].mxu0
      %2233 = vmatprep.mubr.f32.mxu0 0.0
      %2234 = vmatmul.mubr.f32.gmra.mrb[0].mxu0 %v2118
      %v2235 = vpop.f32.mrb[0].mxu0
      %v2236 = vadd.f32 %v2096, %v2235
      %v2237 = vpop.f32.mrb[0].mxu0
      %2238 = vmatprep.mubr.f32.mxu0 0.0
      %2239 = vmatmul.mubr.f32.gmra.mrb[0].mxu0 %v2121
      %v2240 = vpop.f32.mrb[0].mxu0
      %v2241 = vadd.f32 %v2097, %v2240
      %v2242 = vpop.f32.mrb[0].mxu0
      %2243 = vmatprep.mubr.f32.mxu0 0.0
      %2244 = vmatmul.mubr.f32.gmra.mrb[0].mxu0 %v2124
      %v2245 = vpop.f32.mrb[0].mxu0
      %v2246 = vadd.f32 %v2098, %v2245
      %v2247 = vpop.f32.mrb[0].mxu0
      %2248 = vmatprep.mubr.f32.mxu0 0.0
      %2249 = vmatmul.mubr.f32.gmra.mrb[0].mxu0 %v2127
      %v2250 = vpop.f32.mrb[0].mxu0
      %v2251 = vadd.f32 %v2099, %v2250
      %v2252 = vpop.f32.mrb[0].mxu0
      %2253 = vmatprep.mubr.f32.mxu0 0.0
      %2254 = vmatmul.mubr.f32.gmra.mrb[0].mxu0 %v2130
      %v2255 = vpop.f32.mrb[0].mxu0
      %v2256 = vadd.f32 %v2100, %v2255
      %v2257 = vpop.f32.mrb[0].mxu0
      %2258 = vmatprep.mubr.f32.mxu0 0.0
      %2259 = vmatmul.mubr.f32.gmra.mrb[0].mxu0 %v2133
      %v2260 = vpop.f32.mrb[0].mxu0
      %v2261 = vadd.f32 %v2101, %v2260
      %v2262 = vpop.f32.mrb[0].mxu0
      %2263 = vmatprep.mubr.f32.mxu0 0.0
      %2264 = vmatmul.mubr.f32.gmra.mrb[0].mxu0 %v2136
      %v2265 = vpop.f32.mrb[0].mxu0
      %v2266 = vadd.f32 %v2102, %v2265
      %v2267 = vpop.f32.mrb[0].mxu0
      %2268 = vmatprep.mubr.f32.mxu0 0.0
      %2269 = vmatmul.mubr.f32.gmra.mrb[0].mxu0 %v2139
      %v2270 = vpop.f32.mrb[0].mxu0
      %v2271 = vadd.f32 %v2103, %v2270
      %v2272 = vpop.f32.mrb[0].mxu0
      %2273 = vmatprep.mubr.f32.mxu0 0.0
      %2274 = vmatmul.mubr.f32.gmra.mrb[0].mxu0 %v2142
      %v2275 = vpop.f32.mrb[0].mxu0
      %v2276 = vadd.f32 %v2104, %v2275
      %v2277 = vpop.f32.mrb[0].mxu0
      %2278 = vmatprep.mubr.f32.mxu0 0.0
      %2279 = vmatmul.mubr.f32.gmra.mrb[0].mxu0 %v2145
      %v2280 = vpop.f32.mrb[0].mxu0
      %v2281 = vadd.f32 %v2105, %v2280
      %v2282 = vpop.f32.mrb[0].mxu0
      %2283 = vmatprep.mubr.f32.mxu0 0.0
      %2284 = vmatmul.mubr.f32.gmra.mrb[0].mxu0 %v2148
      %v2285 = vpop.f32.mrb[0].mxu0
      %v2286 = vadd.f32 %v2106, %v2285
      %v2287 = vpop.f32.mrb[0].mxu0
      %2288 = vmatprep.mubr.f32.mxu0 0.0
      %2289 = vmatmul.mubr.f32.gmra.mrb[0].mxu0 %v2151
      %v2290 = vpop.f32.mrb[0].mxu0
      %v2291 = vadd.f32 %v2107, %v2290
      %v2292 = vpop.f32.mrb[0].mxu0
      %2293 = vmatprep.mubr.f32.mxu0 0.0
      %2294 = vmatmul.mubr.f32.gmra.mrb[0].mxu0 %v2154
      %v2295 = vpop.f32.mrb[0].mxu0
      %v2296 = vadd.f32 %v2108, %v2295
      %v2297 = vpop.f32.mrb[0].mxu0
      %2298 = vmatprep.mubr.f32.mxu0 0.0
      %2299 = vmatmul.mubr.f32.gmra.mrb[0].mxu0 %v2157
      %v2300 = vpop.f32.mrb[0].mxu0
      %v2301 = vadd.f32 %v2109, %v2300
      %v2302 = vpop.f32.mrb[0].mxu0
      %2303 = vdwg.mxu0
      %v2304 = vsub.f32 2.0, %v1458
      %v2305 = vsub.f32 2.0, %v1459
      %v2306 = vsub.f32 2.0, %v1460
      %v2307 = vsub.f32 2.0, %v1461
      %v2308 = vsub.f32 2.0, %v1462
      %v2309 = vsub.f32 2.0, %v1463
      %v2310 = vsub.f32 2.0, %v1464
      %v2311 = vsub.f32 2.0, %v1465
      %v2312 = vsub.f32 2.0, %v1466
      %v2313 = vsub.f32 2.0, %v1467
      %v2314 = vsub.f32 2.0, %v1468
      %v2315 = vsub.f32 2.0, %v1469
      %v2316 = vsub.f32 2.0, %v1470
      %v2317 = vsub.f32 2.0, %v1471
      %v2318 = vsub.f32 2.0, %v1472
      %v2319 = vsub.f32 2.0, %v1473
      %v2320 = vld [vmem:[%s9] sm:$0x1]
      %2322 = vset.pattern.permute.xlu0 0
      %2323 = vperm.xlu0 %2322, %v2304
      %v2324 = vpop.permute.xlu0 %2323
      %2327 = vset.pattern.permute.xlu0 0
      %2328 = vperm.xlu0 %2327, %v2305
      %v2329 = vpop.permute.xlu0 %2328
      %2332 = vset.pattern.permute.xlu0 0
      %2333 = vperm.xlu0 %2332, %v2306
      %v2334 = vpop.permute.xlu0 %2333
      %2337 = vset.pattern.permute.xlu0 0
      %2338 = vperm.xlu0 %2337, %v2307
      %v2339 = vpop.permute.xlu0 %2338
      %2342 = vset.pattern.permute.xlu0 0
      %2343 = vperm.xlu0 %2342, %v2308
      %v2344 = vpop.permute.xlu0 %2343
      %2347 = vset.pattern.permute.xlu0 0
      %2348 = vperm.xlu0 %2347, %v2309
      %v2349 = vpop.permute.xlu0 %2348
      %2352 = vset.pattern.permute.xlu0 0
      %2353 = vperm.xlu0 %2352, %v2310
      %v2354 = vpop.permute.xlu0 %2353
      %2357 = vset.pattern.permute.xlu0 0
      %2358 = vperm.xlu0 %2357, %v2311
      %v2359 = vpop.permute.xlu0 %2358
      %2362 = vset.pattern.permute.xlu0 0
      %2363 = vperm.xlu0 %2362, %v2312
      %v2364 = vpop.permute.xlu0 %2363
      %2367 = vset.pattern.permute.xlu0 0
      %2368 = vperm.xlu0 %2367, %v2313
      %v2369 = vpop.permute.xlu0 %2368
      %2372 = vset.pattern.permute.xlu0 0
      %2373 = vperm.xlu0 %2372, %v2314
      %v2374 = vpop.permute.xlu0 %2373
      %2377 = vset.pattern.permute.xlu0 0
      %2378 = vperm.xlu0 %2377, %v2315
      %v2379 = vpop.permute.xlu0 %2378
      %2382 = vset.pattern.permute.xlu0 0
      %2383 = vperm.xlu0 %2382, %v2316
      %v2384 = vpop.permute.xlu0 %2383
      %2387 = vset.pattern.permute.xlu0 0
      %2388 = vperm.xlu0 %2387, %v2317
      %v2389 = vpop.permute.xlu0 %2388
      %2392 = vset.pattern.permute.xlu0 0
      %2393 = vperm.xlu0 %2392, %v2318
      %v2394 = vpop.permute.xlu0 %2393
      %2397 = vset.pattern.permute.xlu0 0
      %2398 = vperm.xlu0 %2397, %v2319
      %v2399 = vpop.permute.xlu0 %2398
      %v2402 = vlaneseq
      %v2403 = vshrl.u32 %v2402, 7
      %v2404 = vsub.s32 0, %v2403
      %v2405 = vrot.slane %v2320, %v2404
      %v2407 = vmul.f32 %v2324, %v2405
      %v2408 = vmul.f32 %v2329, %v2405
      %v2409 = vmul.f32 %v2334, %v2405
      %v2410 = vmul.f32 %v2339, %v2405
      %v2411 = vmul.f32 %v2344, %v2405
      %v2412 = vmul.f32 %v2349, %v2405
      %v2413 = vmul.f32 %v2354, %v2405
      %v2414 = vmul.f32 %v2359, %v2405
      %v2415 = vmul.f32 %v2364, %v2405
      %v2416 = vmul.f32 %v2369, %v2405
      %v2417 = vmul.f32 %v2374, %v2405
      %v2418 = vmul.f32 %v2379, %v2405
      %v2419 = vmul.f32 %v2384, %v2405
      %v2420 = vmul.f32 %v2389, %v2405
      %v2421 = vmul.f32 %v2394, %v2405
      %v2422 = vmul.f32 %v2399, %v2405
      %v2423 = vadd.f32 %v2226, %v2407
      %v2424 = vadd.f32 %v2231, %v2408
      %v2425 = vadd.f32 %v2236, %v2409
      %v2426 = vadd.f32 %v2241, %v2410
      %v2427 = vadd.f32 %v2246, %v2411
      %v2428 = vadd.f32 %v2251, %v2412
      %v2429 = vadd.f32 %v2256, %v2413
      %v2430 = vadd.f32 %v2261, %v2414
      %v2431 = vadd.f32 %v2266, %v2415
      %v2432 = vadd.f32 %v2271, %v2416
      %v2433 = vadd.f32 %v2276, %v2417
      %v2434 = vadd.f32 %v2281, %v2418
      %v2435 = vadd.f32 %v2286, %v2419
      %v2436 = vadd.f32 %v2291, %v2420
      %v2437 = vadd.f32 %v2296, %v2421
      %v2438 = vadd.f32 %v2301, %v2422
      %v2439 = vld [vmem:[#allocation6] sm:$0xff]
      %v2440 = vld [vmem:[#allocation6 + $0x8] sm:$0xff]
      %v2441 = vld [vmem:[#allocation6 + $0x10] sm:$0xff]
      %v2442 = vld [vmem:[#allocation6 + $0x18] sm:$0xff]
      %v2443 = vld [vmem:[#allocation6 + $0x20] sm:$0xff]
      %v2444 = vld [vmem:[#allocation6 + $0x28] sm:$0xff]
      %v2445 = vld [vmem:[#allocation6 + $0x30] sm:$0xff]
      %v2446 = vld [vmem:[#allocation6 + $0x38] sm:$0xff]
      %v2447 = vld [vmem:[#allocation6 + $0x40] sm:$0xff]
      %v2448 = vld [vmem:[#allocation6 + $0x48] sm:$0xff]
      %v2449 = vld [vmem:[#allocation6 + $0x50] sm:$0xff]
      %v2450 = vld [vmem:[#allocation6 + $0x58] sm:$0xff]
      %v2451 = vld [vmem:[#allocation6 + $0x60] sm:$0xff]
      %v2452 = vld [vmem:[#allocation6 + $0x68] sm:$0xff]
      %v2453 = vld [vmem:[#allocation6 + $0x70] sm:$0xff]
      %v2454 = vld [vmem:[#allocation6 + $0x78] sm:$0xff]
      %v2455 = vld [vmem:[#allocation5] sm:$0xff]
      %v2456 = vld [vmem:[#allocation5 + $0x8] sm:$0xff]
      %v2457 = vld [vmem:[#allocation5 + $0x10] sm:$0xff]
      %v2458 = vld [vmem:[#allocation5 + $0x18] sm:$0xff]
      %v2459 = vld [vmem:[#allocation5 + $0x20] sm:$0xff]
      %v2460 = vld [vmem:[#allocation5 + $0x28] sm:$0xff]
      %v2461 = vld [vmem:[#allocation5 + $0x30] sm:$0xff]
      %v2462 = vld [vmem:[#allocation5 + $0x38] sm:$0xff]
      %v2463 = vld [vmem:[#allocation5 + $0x40] sm:$0xff]
      %v2464 = vld [vmem:[#allocation5 + $0x48] sm:$0xff]
      %v2465 = vld [vmem:[#allocation5 + $0x50] sm:$0xff]
      %v2466 = vld [vmem:[#allocation5 + $0x58] sm:$0xff]
      %v2467 = vld [vmem:[#allocation5 + $0x60] sm:$0xff]
      %v2468 = vld [vmem:[#allocation5 + $0x68] sm:$0xff]
      %v2469 = vld [vmem:[#allocation5 + $0x70] sm:$0xff]
      %v2470 = vld [vmem:[#allocation5 + $0x78] sm:$0xff]
      %v2471 = vadd.f32 %v2455, %v2423
      %v2472 = vadd.f32 %v2456, %v2424
      %v2473 = vadd.f32 %v2457, %v2425
      %v2474 = vadd.f32 %v2458, %v2426
      %v2475 = vadd.f32 %v2459, %v2427
      %v2476 = vadd.f32 %v2460, %v2428
      %v2477 = vadd.f32 %v2461, %v2429
      %v2478 = vadd.f32 %v2462, %v2430
      %v2479 = vadd.f32 %v2463, %v2431
      %v2480 = vadd.f32 %v2464, %v2432
      %v2481 = vadd.f32 %v2465, %v2433
      %v2482 = vadd.f32 %v2466, %v2434
      %v2483 = vadd.f32 %v2467, %v2435
      %v2484 = vadd.f32 %v2468, %v2436
      %v2485 = vadd.f32 %v2469, %v2437
      %v2486 = vadd.f32 %v2470, %v2438
      %v2487 = vmax.f32 %v2471, 0.0
      %v2488 = vmax.f32 %v2472, 0.0
      %v2489 = vmax.f32 %v2473, 0.0
      %v2490 = vmax.f32 %v2474, 0.0
      %v2491 = vmax.f32 %v2475, 0.0
      %v2492 = vmax.f32 %v2476, 0.0
      %v2493 = vmax.f32 %v2477, 0.0
      %v2494 = vmax.f32 %v2478, 0.0
      %v2495 = vmax.f32 %v2479, 0.0
      %v2496 = vmax.f32 %v2480, 0.0
      %v2497 = vmax.f32 %v2481, 0.0
      %v2498 = vmax.f32 %v2482, 0.0
      %v2499 = vmax.f32 %v2483, 0.0
      %v2500 = vmax.f32 %v2484, 0.0
      %v2501 = vmax.f32 %v2485, 0.0
      %v2502 = vmax.f32 %v2486, 0.0
      %v2503 = vadd.f32 %v2439, %v2487
      %v2504 = vadd.f32 %v2440, %v2488
      %v2505 = vadd.f32 %v2441, %v2489
      %v2506 = vadd.f32 %v2442, %v2490
      %v2507 = vadd.f32 %v2443, %v2491
      %v2508 = vadd.f32 %v2444, %v2492
      %v2509 = vadd.f32 %v2445, %v2493
      %v2510 = vadd.f32 %v2446, %v2494
      %v2511 = vadd.f32 %v2447, %v2495
      %v2512 = vadd.f32 %v2448, %v2496
      %v2513 = vadd.f32 %v2449, %v2497
      %v2514 = vadd.f32 %v2450, %v2498
      %v2515 = vadd.f32 %v2451, %v2499
      %v2516 = vadd.f32 %v2452, %v2500
      %v2517 = vadd.f32 %v2453, %v2501
      %v2518 = vadd.f32 %v2454, %v2502
      %2519 = vst.msk [vmem:[#allocation6] sm:$0xff] %vm2110, %v2503
      %2520 = vst.msk [vmem:[#allocation6 + $0x8] sm:$0xff] %vm2110, %v2504
      %2521 = vst.msk [vmem:[#allocation6 + $0x10] sm:$0xff] %vm2110, %v2505
      %2522 = vst.msk [vmem:[#allocation6 + $0x18] sm:$0xff] %vm2110, %v2506
      %2523 = vst.msk [vmem:[#allocation6 + $0x20] sm:$0xff] %vm2110, %v2507
      %2524 = vst.msk [vmem:[#allocation6 + $0x28] sm:$0xff] %vm2110, %v2508
      %2525 = vst.msk [vmem:[#allocation6 + $0x30] sm:$0xff] %vm2110, %v2509
      %2526 = vst.msk [vmem:[#allocation6 + $0x38] sm:$0xff] %vm2110, %v2510
      %2527 = vst.msk [vmem:[#allocation6 + $0x40] sm:$0xff] %vm2110, %v2511
      %2528 = vst.msk [vmem:[#allocation6 + $0x48] sm:$0xff] %vm2110, %v2512
      %2529 = vst.msk [vmem:[#allocation6 + $0x50] sm:$0xff] %vm2110, %v2513
      %2530 = vst.msk [vmem:[#allocation6 + $0x58] sm:$0xff] %vm2110, %v2514
      %2531 = vst.msk [vmem:[#allocation6 + $0x60] sm:$0xff] %vm2110, %v2515
      %2532 = vst.msk [vmem:[#allocation6 + $0x68] sm:$0xff] %vm2110, %v2516
      %2533 = vst.msk [vmem:[#allocation6 + $0x70] sm:$0xff] %vm2110, %v2517
      %2534 = vst.msk [vmem:[#allocation6 + $0x78] sm:$0xff] %vm2110, %v2518
      %p2535 = scmp.eq.s32.totalorder %s30, 2
      // Predicated region
      $region73: #{tpu_custom_call.1} parent=67 // pred_check
        %p2536 = pneg %p2535
      $region74: #{tpu_custom_call.1} parent=67 // pred_check_branch
        %2538 = sbr.rel (%p2536) target = $region76
      $region75: #{tpu_custom_call.1} parent=67 // pred_region
        %v2539 = vld [vmem:[#allocation6] sm:$0xff]
        %v2540 = vld [vmem:[#allocation6 + $0x8] sm:$0xff]
        %v2541 = vld [vmem:[#allocation6 + $0x10] sm:$0xff]
        %v2542 = vld [vmem:[#allocation6 + $0x18] sm:$0xff]
        %v2543 = vld [vmem:[#allocation6 + $0x20] sm:$0xff]
        %v2544 = vld [vmem:[#allocation6 + $0x28] sm:$0xff]
        %v2545 = vld [vmem:[#allocation6 + $0x30] sm:$0xff]
        %v2546 = vld [vmem:[#allocation6 + $0x38] sm:$0xff]
        %v2547 = vld [vmem:[#allocation6 + $0x40] sm:$0xff]
        %v2548 = vld [vmem:[#allocation6 + $0x48] sm:$0xff]
        %v2549 = vld [vmem:[#allocation6 + $0x50] sm:$0xff]
        %v2550 = vld [vmem:[#allocation6 + $0x58] sm:$0xff]
        %v2551 = vld [vmem:[#allocation6 + $0x60] sm:$0xff]
        %v2552 = vld [vmem:[#allocation6 + $0x68] sm:$0xff]
        %v2553 = vld [vmem:[#allocation6 + $0x70] sm:$0xff]
        %v2554 = vld [vmem:[#allocation6 + $0x78] sm:$0xff]
        %v2555 = vld [vmem:[%s10] sm:$0xff]
        %v2556 = vld [vmem:[%s10 + $0x8] sm:$0xff]
        %v2557 = vld [vmem:[%s10 + $0x10] sm:$0xff]
        %v2558 = vld [vmem:[%s10 + $0x18] sm:$0xff]
        %v2559 = vld [vmem:[%s11] sm:$0x1]
        %v2561 = vlaneseq
        %v2562 = vshrl.u32 %v2561, 7
        %v2563 = vsub.s32 0, %v2562
        %v2564 = vrot.slane %v2559, %v2563
        %v2567 = vsel %vm2110, %v2539, 0
        %v2570 = vsel %vm2110, %v2540, 0
        %v2573 = vsel %vm2110, %v2541, 0
        %v2576 = vsel %vm2110, %v2542, 0
        %v2579 = vsel %vm2110, %v2543, 0
        %v2582 = vsel %vm2110, %v2544, 0
        %v2585 = vsel %vm2110, %v2545, 0
        %v2588 = vsel %vm2110, %v2546, 0
        %v2591 = vsel %vm2110, %v2547, 0
        %v2594 = vsel %vm2110, %v2548, 0
        %v2597 = vsel %vm2110, %v2549, 0
        %v2600 = vsel %vm2110, %v2550, 0
        %v2603 = vsel %vm2110, %v2551, 0
        %v2606 = vsel %vm2110, %v2552, 0
        %v2609 = vsel %vm2110, %v2553, 0
        %v2612 = vsel %vm2110, %v2554, 0
        %2614 = vmatprep.subr.mxu0 0.0
        %2615 = vmatpush1.msra.mxu0 %v2555
        %2616 = vmatprep.subr.mxu0 0.0
        %2617 = vmatpush1.msra.mxu0 %v2556
        %2618 = vmatprep.subr.mxu0 0.0
        %2619 = vmatpush1.msra.mxu0 %v2557
        %2620 = vmatprep.subr.mxu0 0.0
        %2621 = vmatpush1.msra.mxu0 %v2558
        %2622 = vmatprep.subr.mxu0 0.0
        %2623 = vmatpush1.msra.mxu0 0.0
        %2624 = vmatprep.subr.mxu0 0.0
        %2625 = vmatpush1.msra.mxu0 0.0
        %2626 = vmatprep.subr.mxu0 0.0
        %2627 = vmatpush1.msra.mxu0 0.0
        %2628 = vmatprep.subr.mxu0 0.0
        %2629 = vmatpush1.msra.mxu0 0.0
        %2630 = vmatprep.subr.mxu0 0.0
        %2631 = vmatpush1.msra.mxu0 0.0
        %2632 = vmatprep.subr.mxu0 0.0
        %2633 = vmatpush1.msra.mxu0 0.0
        %2634 = vmatprep.subr.mxu0 0.0
        %2635 = vmatpush1.msra.mxu0 0.0
        %2636 = vmatprep.subr.mxu0 0.0
        %2637 = vmatpush1.msra.mxu0 0.0
        %2638 = vmatprep.subr.mxu0 0.0
        %2639 = vmatpush1.msra.mxu0 0.0
        %2640 = vmatprep.subr.mxu0 0.0
        %2641 = vmatpush1.msra.mxu0 0.0
        %2642 = vmatprep.subr.mxu0 0.0
        %2643 = vmatpush1.msra.mxu0 0.0
        %2644 = vmatprep.subr.mxu0 0.0
        %2645 = vmatpush1.msra.mxu0 0.0
        %2646 = vmatprep.subr.mxu0 0.0
        %2647 = vmatpush1.msra.mxu0 0.0
        %2648 = vmatprep.subr.mxu0 0.0
        %2649 = vmatpush1.msra.mxu0 0.0
        %2650 = vmatprep.subr.mxu0 0.0
        %2651 = vmatpush1.msra.mxu0 0.0
        %2652 = vmatprep.subr.mxu0 0.0
        %2653 = vmatpush1.msra.mxu0 0.0
        %2654 = vmatprep.subr.mxu0 0.0
        %2655 = vmatpush1.msra.mxu0 0.0
        %2656 = vmatprep.subr.mxu0 0.0
        %2657 = vmatpush1.msra.mxu0 0.0
        %2658 = vmatprep.subr.mxu0 0.0
        %2659 = vmatpush1.msra.mxu0 0.0
        %2660 = vmatprep.subr.mxu0 0.0
        %2661 = vmatpush1.msra.mxu0 0.0
        %2662 = vmatprep.subr.mxu0 0.0
        %2663 = vmatpush1.msra.mxu0 0.0
        %2664 = vmatprep.subr.mxu0 0.0
        %2665 = vmatpush1.msra.mxu0 0.0
        %2666 = vmatprep.subr.mxu0 0.0
        %2667 = vmatpush1.msra.mxu0 0.0
        %2668 = vmatprep.subr.mxu0 0.0
        %2669 = vmatpush1.msra.mxu0 0.0
        %2670 = vmatprep.subr.mxu0 0.0
        %2671 = vmatpush1.msra.mxu0 0.0
        %2672 = vmatprep.subr.mxu0 0.0
        %2673 = vmatpush1.msra.mxu0 0.0
        %2674 = vmatprep.subr.mxu0 0.0
        %2675 = vmatpush1.msra.mxu0 0.0
        %2676 = vmatprep.subr.mxu0 0.0
        %2677 = vmatpush1.msra.mxu0 0.0
        %2678 = vmatprep.mubr.f32.mxu0 0.0
        %2679 = vmatmul.mubr.f32.gmra.mrb[0].mxu0 %v2567
        %v2680 = vpop.f32.mrb[0].mxu0
        %v2681 = vadd.f32 %v2564, %v2680
        %v2682 = vpop.f32.mrb[0].mxu0
        %2683 = vmatprep.mubr.f32.mxu0 0.0
        %2684 = vmatmul.mubr.f32.gmra.mrb[0].mxu0 %v2570
        %v2685 = vpop.f32.mrb[0].mxu0
        %v2686 = vadd.f32 %v2564, %v2685
        %v2687 = vpop.f32.mrb[0].mxu0
        %2688 = vmatprep.mubr.f32.mxu0 0.0
        %2689 = vmatmul.mubr.f32.gmra.mrb[0].mxu0 %v2573
        %v2690 = vpop.f32.mrb[0].mxu0
        %v2691 = vadd.f32 %v2564, %v2690
        %v2692 = vpop.f32.mrb[0].mxu0
        %2693 = vmatprep.mubr.f32.mxu0 0.0
        %2694 = vmatmul.mubr.f32.gmra.mrb[0].mxu0 %v2576
        %v2695 = vpop.f32.mrb[0].mxu0
        %v2696 = vadd.f32 %v2564, %v2695
        %v2697 = vpop.f32.mrb[0].mxu0
        %2698 = vmatprep.mubr.f32.mxu0 0.0
        %2699 = vmatmul.mubr.f32.gmra.mrb[0].mxu0 %v2579
        %v2700 = vpop.f32.mrb[0].mxu0
        %v2701 = vadd.f32 %v2564, %v2700
        %v2702 = vpop.f32.mrb[0].mxu0
        %2703 = vmatprep.mubr.f32.mxu0 0.0
        %2704 = vmatmul.mubr.f32.gmra.mrb[0].mxu0 %v2582
        %v2705 = vpop.f32.mrb[0].mxu0
        %v2706 = vadd.f32 %v2564, %v2705
        %v2707 = vpop.f32.mrb[0].mxu0
        %2708 = vmatprep.mubr.f32.mxu0 0.0
        %2709 = vmatmul.mubr.f32.gmra.mrb[0].mxu0 %v2585
        %v2710 = vpop.f32.mrb[0].mxu0
        %v2711 = vadd.f32 %v2564, %v2710
        %v2712 = vpop.f32.mrb[0].mxu0
        %2713 = vmatprep.mubr.f32.mxu0 0.0
        %2714 = vmatmul.mubr.f32.gmra.mrb[0].mxu0 %v2588
        %v2715 = vpop.f32.mrb[0].mxu0
        %v2716 = vadd.f32 %v2564, %v2715
        %v2717 = vpop.f32.mrb[0].mxu0
        %2718 = vmatprep.mubr.f32.mxu0 0.0
        %2719 = vmatmul.mubr.f32.gmra.mrb[0].mxu0 %v2591
        %v2720 = vpop.f32.mrb[0].mxu0
        %v2721 = vadd.f32 %v2564, %v2720
        %v2722 = vpop.f32.mrb[0].mxu0
        %2723 = vmatprep.mubr.f32.mxu0 0.0
        %2724 = vmatmul.mubr.f32.gmra.mrb[0].mxu0 %v2594
        %v2725 = vpop.f32.mrb[0].mxu0
        %v2726 = vadd.f32 %v2564, %v2725
        %v2727 = vpop.f32.mrb[0].mxu0
        %2728 = vmatprep.mubr.f32.mxu0 0.0
        %2729 = vmatmul.mubr.f32.gmra.mrb[0].mxu0 %v2597
        %v2730 = vpop.f32.mrb[0].mxu0
        %v2731 = vadd.f32 %v2564, %v2730
        %v2732 = vpop.f32.mrb[0].mxu0
        %2733 = vmatprep.mubr.f32.mxu0 0.0
        %2734 = vmatmul.mubr.f32.gmra.mrb[0].mxu0 %v2600
        %v2735 = vpop.f32.mrb[0].mxu0
        %v2736 = vadd.f32 %v2564, %v2735
        %v2737 = vpop.f32.mrb[0].mxu0
        %2738 = vmatprep.mubr.f32.mxu0 0.0
        %2739 = vmatmul.mubr.f32.gmra.mrb[0].mxu0 %v2603
        %v2740 = vpop.f32.mrb[0].mxu0
        %v2741 = vadd.f32 %v2564, %v2740
        %v2742 = vpop.f32.mrb[0].mxu0
        %2743 = vmatprep.mubr.f32.mxu0 0.0
        %2744 = vmatmul.mubr.f32.gmra.mrb[0].mxu0 %v2606
        %v2745 = vpop.f32.mrb[0].mxu0
        %v2746 = vadd.f32 %v2564, %v2745
        %v2747 = vpop.f32.mrb[0].mxu0
        %2748 = vmatprep.mubr.f32.mxu0 0.0
        %2749 = vmatmul.mubr.f32.gmra.mrb[0].mxu0 %v2609
        %v2750 = vpop.f32.mrb[0].mxu0
        %v2751 = vadd.f32 %v2564, %v2750
        %v2752 = vpop.f32.mrb[0].mxu0
        %2753 = vmatprep.mubr.f32.mxu0 0.0
        %2754 = vmatmul.mubr.f32.gmra.mrb[0].mxu0 %v2612
        %v2755 = vpop.f32.mrb[0].mxu0
        %v2756 = vadd.f32 %v2564, %v2755
        %v2757 = vpop.f32.mrb[0].mxu0
        %2758 = vdwg.mxu0
        %2759 = vst.msk [vmem:[%s465] sm:$0xff] %vm1970, %v2681
        %2760 = vst.msk [vmem:[%s465 + $0x8] sm:$0xff] %vm1970, %v2686
        %2761 = vst.msk [vmem:[%s465 + $0x10] sm:$0xff] %vm1970, %v2691
        %2762 = vst.msk [vmem:[%s465 + $0x18] sm:$0xff] %vm1970, %v2696
        %2763 = vst.msk [vmem:[%s465 + $0x20] sm:$0xff] %vm1970, %v2701
        %2764 = vst.msk [vmem:[%s465 + $0x28] sm:$0xff] %vm1970, %v2706
        %2765 = vst.msk [vmem:[%s465 + $0x30] sm:$0xff] %vm1970, %v2711
        %2766 = vst.msk [vmem:[%s465 + $0x38] sm:$0xff] %vm1970, %v2716
        %2767 = vst.msk [vmem:[%s465 + $0x40] sm:$0xff] %vm1970, %v2721
        %2768 = vst.msk [vmem:[%s465 + $0x48] sm:$0xff] %vm1970, %v2726
        %2769 = vst.msk [vmem:[%s465 + $0x50] sm:$0xff] %vm1970, %v2731
        %2770 = vst.msk [vmem:[%s465 + $0x58] sm:$0xff] %vm1970, %v2736
        %2771 = vst.msk [vmem:[%s465 + $0x60] sm:$0xff] %vm1970, %v2741
        %2772 = vst.msk [vmem:[%s465 + $0x68] sm:$0xff] %vm1970, %v2746
        %2773 = vst.msk [vmem:[%s465 + $0x70] sm:$0xff] %vm1970, %v2751
        %2774 = vst.msk [vmem:[%s465 + $0x78] sm:$0xff] %vm1970, %v2756
      $region76: #{tpu_custom_call.1} parent=67 // pred_fallthru
        _
      %s2775 = smul.u32 16, %s29
      %p2776 = scmp.lt.s32.totalorder %s2775, 15
      %s2777 = scalar_select %p2776, %s2775, 15
      %s2778 = smul.addr %s2777, 8
      %s2779 = scalar_lea.vmem %s12, %s2778
      // Predicated region
      $region77: #{tpu_custom_call.1} parent=67 // pred_check
        %p2780 = pneg %p319
      $region78: #{tpu_custom_call.1} parent=67 // pred_check_branch
        %2782 = sbr.rel (%p2780) target = $region80
      $region79: #{tpu_custom_call.1} parent=67 // pred_region
        %s2783 = smul.u32 16, %s29
      $region80: #{tpu_custom_call.1} parent=67 // pred_fallthru
        _
      // Predicated region
      $region81: #{tpu_custom_call.1} parent=67 // pred_check
        %p2784 = pneg %p319
      $region82: #{tpu_custom_call.1} parent=67 // pred_check_branch
        %2786 = sbr.rel (%p2784) target = $region84
      $region83: #{tpu_custom_call.1} parent=67 // pred_region
        %s2787 = smul.u32 16, %s29
        %p2788 = scmp.lt.s32.totalorder %s2787, 15
        %s2789 = scalar_select %p2788, %s2787, 15
        %s2790 = smul.addr %s2789, 8
        %s2791 = scalar_lea.vmem %s12, %s2790
      $region84: #{tpu_custom_call.1} parent=67 // pred_fallthru
        _
    $region68: #{tpu_custom_call.1} parent=5 // pred_fallthru
      _
    %p2792 = scmp.le.s32.totalorder 2, %s20
    // Predicated region
    $region85: #{tpu_custom_call.1} parent=5 // pred_check
      %p2793 = pneg %p2792
    $region86: #{tpu_custom_call.1} parent=5 // pred_check_branch
      %2795 = sbr.rel (%p2793) target = $region88
    $region87: #{tpu_custom_call.1} parent=5 // pred_region
      %s2796 = ssub.s32 %s20, 2
    $region88: #{tpu_custom_call.1} parent=5 // pred_fallthru
      _
  $region6: #{tpu_custom_call.1} parent=0 // loop_footer
    %s24 = sadd.s32 1, %s20
  $region7: #{tpu_custom_call.1} parent=0 // loop_footer_branch
    %19 = sbr.rel target = $region3
  $region8: #{tpu_custom_call.1} parent=0 // loop_exit
    _

</llo_original>
